<compile_context>
chip_gen: v7x
topology: tpu7x:2x2x1
jax: 0.10.0
libtpu: 0.0.40
codegen_flags: <defaults>
</compile_context>

<pallas_src>
import functools

import jax
import jax.numpy as jnp
from jax.experimental import pallas as pl
from jax.experimental.pallas import tpu as pltpu
import numpy as np


# ----------------------------------------------------------------------------
# Kernels
# ----------------------------------------------------------------------------
def _attend_and_store(x_full_ref, wq_ref, bq_ref, gamma_ref, k, v,
                      out_ref, attn_ref, tq):
    """Per-query-tile body: Q projection, exact softmax, output matmul."""
    qi = pl.program_id(1)

    # Query tile sliced out of the already-resident full slab: no second HBM
    # read of x and no extra double-buffered (C, TQ) input allocation.
    start = pl.multiple_of(qi * tq, tq)
    x_q = x_full_ref[:, pl.ds(start, tq)]                           # (C, TQ)
    q = jnp.dot(wq_ref[...], x_q,
                preferred_element_type=jnp.float32) + bq_ref[...]   # (C, TQ)

    # energy[i, j] = <q[:, i], k[:, j]> -> contract channel dim (no transpose).
    energy = jax.lax.dot_general(
        q, k, (((0,), (0,)), ((), ())),
        preferred_element_type=jnp.float32)                         # (TQ, N)

    # Exact row softmax (rows are complete within a query tile).
    m = jnp.max(energy, axis=-1, keepdims=True)
    e = jnp.exp(energy - m)
    denom = jnp.sum(e, axis=-1, keepdims=True)
    attn = e * pl.reciprocal(denom, approx=False)                   # (TQ, N)

    # torch: out = bmm(V(C,N), A^T) -> contract token dim of V and attn,
    # producing the lane-dense (C, TQ) output tile directly.
    out = jax.lax.dot_general(
        v, attn, (((1,), (1,)), ((), ())),
        preferred_element_type=jnp.float32)                         # (C, TQ)

    gamma = gamma_ref[0]
    out_ref[...] = (gamma * out + x_q).astype(out_ref.dtype)
    attn_ref[...] = attn.astype(attn_ref.dtype)


def _kernel_carry_kv(x_full_ref, wq_ref, bq_ref, wk_ref, bk_ref,
                     wv_ref, bv_ref, gamma_ref, out_ref, attn_ref,
                     k_scr, v_scr, *, tq):
    # K/V over the full token set computed once per batch element (qi == 0)
    # into VMEM scratch and reused across that batch's query tiles.
    @pl.when(pl.program_id(1) == 0)
    def _():
        x_full = x_full_ref[...]                                    # (C, N)
        k_scr[...] = jnp.dot(wk_ref[...], x_full,
                             preferred_element_type=jnp.float32) + bk_ref[...]
        v_scr[...] = jnp.dot(wv_ref[...], x_full,
                             preferred_element_type=jnp.float32) + bv_ref[...]

    _attend_and_store(x_full_ref, wq_ref, bq_ref, gamma_ref,
                      k_scr[...], v_scr[...], out_ref, attn_ref, tq)


def _kernel_recompute_kv(x_full_ref, wq_ref, bq_ref, wk_ref, bk_ref,
                         wv_ref, bv_ref, gamma_ref, out_ref, attn_ref, *, tq):
    # No cross-step scratch carry: K/V recomputed every query tile so both
    # grid axes can be "parallel" (keeps both v7x TensorCores busy for small
    # B).  Extra MXU flops are ~C/TQ relative and the kernel is HBM-bound.
    x_full = x_full_ref[...]                                        # (C, N)
    k = jnp.dot(wk_ref[...], x_full,
                preferred_element_type=jnp.float32) + bk_ref[...]
    v = jnp.dot(wv_ref[...], x_full,
                preferred_element_type=jnp.float32) + bv_ref[...]
    _attend_and_store(x_full_ref, wq_ref, bq_ref, gamma_ref,
                      k, v, out_ref, attn_ref, tq)


# ----------------------------------------------------------------------------
# VMEM-aware tiling
# ----------------------------------------------------------------------------
def _round_up(x, m):
    return (x + m - 1) // m * m


def _vmem_capacity_bytes():
    try:
        cap = getattr(pltpu.get_tpu_info(), "vmem_capacity_bytes", None)
        if cap:
            return int(cap)
    except Exception:
        pass
    return 64 * 1024 * 1024     # conservative fallback (v7x per-TensorCore)


def _estimate_vmem_bytes(tq, n, c, attn_itemsize):
    f32 = 4
    c_pad = max(_round_up(c, 8), 8)
    n_pad = _round_up(n, 128)
    tq_pad = max(_round_up(tq, 8), 8)
    # double-buffered (TQ, N) attn output block + energy/exp/attn f32 temps
    attn_bytes = 2 * tq_pad * n_pad * attn_itemsize + 3 * tq_pad * n_pad * f32
    # x slab (double-buffered input) + K/V (scratch or local temporaries)
    xkv_bytes = (2 + 2) * c_pad * n_pad * f32
    # out block (double-buffered), q tile, weights/biases, slack
    small = 4 * c_pad * max(tq_pad, 128) * f32 + 16 * c_pad * 128 * f32 + (1 << 20)
    return attn_bytes + xkv_bytes + small


def _pick_query_tile(n, c, attn_itemsize, vmem_cap):
    headroom = 4 * 1024 * 1024
    if vmem_cap <= 64 * 1024 * 1024:            # v7x: 64 MiB per TensorCore
        cands = [128] if n >= 8192 else [256, 128]
    else:                                       # v5e / v6e: 128 MiB
        cands = [1024, 512, 256, 128]
    divisors = [t for t in cands if t < n and n % t == 0]
    fitting = [t for t in divisors
               if _estimate_vmem_bytes(t, n, c, attn_itemsize) <= vmem_cap - headroom]
    if fitting:
        return max(fitting)
    if divisors:
        return min(divisors)    # best effort for very large N
        # TODO(synk): for N >= ~16k add a key-dim grid axis + online softmax so
        # the per-step footprint is O(TQ*TN) instead of O(TQ*N).
    return n                    # small / irregular N: one tile per batch elem


# ----------------------------------------------------------------------------
# Wrapper
# ----------------------------------------------------------------------------
def self_attn_forward(x_nchw, wq, bq, wk, bk, wv, bv, gamma, *,
                      tq=None, attn_dtype=jnp.float32):
    """x_nchw: (B, C, W, H) float32. Returns (out_nchw, attention, gamma)."""
    B, C, W, H = x_nchw.shape
    N = W * H

    # NCHW -> (B, C, N): pure reshape, no transpose / extra HBM traffic.
    x_cn = x_nchw.reshape(B, C, N).astype(jnp.float32)

    attn_itemsize = jnp.dtype(attn_dtype).itemsize
    vmem_cap = _vmem_capacity_bytes()
    if tq is None:
        tq = _pick_query_tile(N, C, attn_itemsize, vmem_cap)
    assert N % tq == 0, "query tile must divide the token count"
    n_qt = N // tq

    # B == 1: recompute K/V per tile so both grid axes are 'parallel'
    # (v7x 2-TC utilization); otherwise carry K/V in scratch per batch.
    carry_kv = B >= 2

    wq_f = wq.astype(jnp.float32)
    wk_f = wk.astype(jnp.float32)
    wv_f = wv.astype(jnp.float32)
    bq2 = bq.reshape(C, 1).astype(jnp.float32)
    bk2 = bk.reshape(C, 1).astype(jnp.float32)
    bv2 = bv.reshape(C, 1).astype(jnp.float32)
    gamma1 = gamma.reshape(1).astype(jnp.float32)

    est = _estimate_vmem_bytes(tq, N, C, attn_itemsize)
    vmem_limit = int(min(max(int(est * 1.25), 32 * 1024 * 1024),
                         vmem_cap - 2 * 1024 * 1024))

    w_spec = pl.BlockSpec((C, C), lambda b, qi: (0, 0))
    b_spec = pl.BlockSpec((C, 1), lambda b, qi: (0, 0))

    in_specs = [
        pl.BlockSpec((None, C, N), lambda b, qi: (b, 0, 0)),     # x full slab
        w_spec, b_spec,                                          # Wq, bq
        w_spec, b_spec,                                          # Wk, bk
        w_spec, b_spec,                                          # Wv, bv
        pl.BlockSpec(memory_space=pltpu.MemorySpace.SMEM),       # gamma scalar
    ]
    out_specs = (
        pl.BlockSpec((None, C, tq), lambda b, qi: (b, 0, qi)),   # out (B, C, N)
        pl.BlockSpec((None, tq, N), lambda b, qi: (b, qi, 0)),   # attn (B, N, N)
    )

    if carry_kv:
        kernel = functools.partial(_kernel_carry_kv, tq=tq)
        scratch = [pltpu.VMEM((C, N), jnp.float32),    # K cache (per batch)
                   pltpu.VMEM((C, N), jnp.float32)]    # V cache (per batch)
        dims = ("parallel", "arbitrary")
    else:
        kernel = functools.partial(_kernel_recompute_kv, tq=tq)
        scratch = []
        dims = ("parallel", "parallel")

    out_cn, attn = pl.pallas_call(
        kernel,
        out_shape=(jax.ShapeDtypeStruct((B, C, N), jnp.float32),
                   jax.ShapeDtypeStruct((B, N, N), attn_dtype)),
        grid=(B, n_qt),
        in_specs=in_specs,
        out_specs=out_specs,
        scratch_shapes=scratch,
        compiler_params=pltpu.CompilerParams(
            dimension_semantics=dims,
            vmem_limit_bytes=vmem_limit),
    )(x_cn, wq_f, bq2, wk_f, bk2, wv_f, bv2, gamma1)

    # (B, C, N) -> NCHW is again a pure reshape.
    out_nchw = out_cn.reshape(B, C, W, H)
    return out_nchw, attn, gamma


# ----------------------------------------------------------------------------
# Reference + test
# ----------------------------------------------------------------------------
def _reference(x_nchw, wq, bq, wk, bk, wv, bv, gamma):
    B, C, W, H = x_nchw.shape
    N = W * H
    xf = x_nchw.reshape(B, C, N)                          # (B, C, N)
    q = jnp.einsum('oc,bcn->bon', wq, xf) + bq[None, :, None]
    k = jnp.einsum('oc,bcn->bon', wk, xf) + bk[None, :, None]
    v = jnp.einsum('oc,bcn->bon', wv, xf) + bv[None, :, None]
    energy = jnp.einsum('bcn,bcm->bnm', q, k)             # (B, N, N)
    attn = jax.nn.softmax(energy, axis=-1)
    out = jnp.einsum('bcn,bmn->bcm', v, attn)             # (B, C, N)
    out = out.reshape(B, C, W, H)
    out = gamma.reshape(()) * out + x_nchw
    return out, attn


if __name__ == "__main__":
    B, C, W, H = 2, 4, 16, 16
    key = jax.random.PRNGKey(0)
    kx, kq, kk, kv, kbq, kbk, kbv = jax.random.split(key, 7)

    x = jax.random.normal(kx, (B, C, W, H), dtype=jnp.float32)

    # parameters: Conv2d(in_dim, in_dim, kernel_size=1) -> (C, C) weight, (C,) bias
    scale = 1.0 / np.sqrt(C)
    wq = jax.random.uniform(kq, (C, C), jnp.float32, -scale, scale)
    wk = jax.random.uniform(kk, (C, C), jnp.float32, -scale, scale)
    wv = jax.random.uniform(kv, (C, C), jnp.float32, -scale, scale)
    bq = jax.random.uniform(kbq, (C,), jnp.float32, -scale, scale)
    bk = jax.random.uniform(kbk, (C,), jnp.float32, -scale, scale)
    bv = jax.random.uniform(kbv, (C,), jnp.float32, -scale, scale)
    gamma = jnp.zeros((1,), dtype=jnp.float32)   # matches nn.Parameter(torch.zeros(1))

    out, attn, g = self_attn_forward(x, wq, bq, wk, bk, wv, bv, gamma)
    jax.block_until_ready((out, attn, g))

    out_ref, attn_ref = _reference(x, wq, bq, wk, bk, wv, bv, gamma)
    np.testing.assert_allclose(np.asarray(out), np.asarray(out_ref), rtol=1e-5, atol=1e-5)
    np.testing.assert_allclose(np.asarray(attn), np.asarray(attn_ref), rtol=1e-5, atol=1e-5)

    print("KERNEL_OK")
</pallas_src>

<mosaic_0001>
module attributes {stable_mosaic.version = 11 : i64} {
  func.func @_kernel_carry_kv(%arg0: i32, %arg1: i32, %arg2: memref<1x4x256xf32, #tpu.memory_space<vmem>>, %arg3: memref<4x4xf32, #tpu.memory_space<vmem>>, %arg4: memref<4x1xf32, #tpu.memory_space<vmem>>, %arg5: memref<4x4xf32, #tpu.memory_space<vmem>>, %arg6: memref<4x1xf32, #tpu.memory_space<vmem>>, %arg7: memref<4x4xf32, #tpu.memory_space<vmem>>, %arg8: memref<4x1xf32, #tpu.memory_space<vmem>>, %arg9: memref<1xf32, #tpu.memory_space<smem>>, %arg10: memref<1x4x128xf32, #tpu.memory_space<vmem>>, %arg11: memref<1x128x256xf32, #tpu.memory_space<vmem>>, %arg12: memref<4x256xf32, #tpu.memory_space<vmem>>, %arg13: memref<4x256xf32, #tpu.memory_space<vmem>>) attributes {dimension_semantics = [#tpu.dimension_semantics<parallel>, #tpu.dimension_semantics<arbitrary>], iteration_bounds = array<i64: 2, 2>, scalar_prefetch = 0 : i64, scratch_operands = 2 : i64, tpu.core_type = #tpu.core_type<tc>, window_params = [{transform_indices = @transform_0, window_bounds = array<i64: 1, 4, 256>}, {pipeline_mode = #tpu.pipeline_mode<synchronous>, transform_indices = @transform_1, window_bounds = array<i64: 4, 4>}, {pipeline_mode = #tpu.pipeline_mode<synchronous>, transform_indices = @transform_2, window_bounds = array<i64: 4, 1>}, {pipeline_mode = #tpu.pipeline_mode<synchronous>, transform_indices = @transform_3, window_bounds = array<i64: 4, 4>}, {pipeline_mode = #tpu.pipeline_mode<synchronous>, transform_indices = @transform_4, window_bounds = array<i64: 4, 1>}, {pipeline_mode = #tpu.pipeline_mode<synchronous>, transform_indices = @transform_5, window_bounds = array<i64: 4, 4>}, {pipeline_mode = #tpu.pipeline_mode<synchronous>, transform_indices = @transform_6, window_bounds = array<i64: 4, 1>}, {transform_indices = @transform_7, window_bounds = array<i64: 1>}, {transform_indices = @transform_8, window_bounds = array<i64: 1, 4, 128>}, {transform_indices = @transform_9, window_bounds = array<i64: 1, 128, 256>}]} {
    %c0_i32 = arith.constant 0 : i32
    %0 = arith.cmpi eq, %arg1, %c0_i32 : i32
    %1 = arith.extui %0 : i1 to i32
    %c0_i32_0 = arith.constant 0 : i32
    %2 = arith.cmpi ne, %1, %c0_i32_0 : i32
    scf.if %2 {
      %c0_21 = arith.constant 0 : index
      %c0_22 = arith.constant 0 : index
      %c0_23 = arith.constant 0 : index
      %37 = vector.load %arg2[%c0_21, %c0_22, %c0_23] : memref<1x4x256xf32, #tpu.memory_space<vmem>>, vector<1x4x256xf32>
      %38 = vector.shape_cast %37 : vector<1x4x256xf32> to vector<4x256xf32>
      %c0_24 = arith.constant 0 : index
      %c0_25 = arith.constant 0 : index
      %39 = vector.load %arg5[%c0_24, %c0_25] : memref<4x4xf32, #tpu.memory_space<vmem>>, vector<4x4xf32>
      %cst_26 = arith.constant dense<0.000000e+00> : vector<4x256xf32>
      %40 = tpu.matmul %39, %38, %cst_26 {dimension_numbers = #tpu.dot_dimension_numbers<[1], [0], [0], [1], [0, 0, 1, 1], [], []>} : vector<4x4xf32>, vector<4x256xf32>, vector<4x256xf32> -> vector<4x256xf32>
      %c0_27 = arith.constant 0 : index
      %c0_28 = arith.constant 0 : index
      %41 = vector.load %arg6[%c0_27, %c0_28] : memref<4x1xf32, #tpu.memory_space<vmem>>, vector<4x1xf32>
      %42 = vector.broadcast %41 : vector<4x1xf32> to vector<4x256xf32>
      %43 = arith.addf %40, %42 : vector<4x256xf32>
      %c0_29 = arith.constant 0 : index
      %c0_30 = arith.constant 0 : index
      %44 = vector.load %arg12[%c0_29, %c0_30] : memref<4x256xf32, #tpu.memory_space<vmem>>, vector<4x256xf32>
      tpu.vector_store %arg12[%c0_29, %c0_30], %43 {strides = array<i32>} : memref<4x256xf32, #tpu.memory_space<vmem>>, vector<4x256xf32>,
      %c0_31 = arith.constant 0 : index
      %c0_32 = arith.constant 0 : index
      %45 = vector.load %arg7[%c0_31, %c0_32] : memref<4x4xf32, #tpu.memory_space<vmem>>, vector<4x4xf32>
      %cst_33 = arith.constant dense<0.000000e+00> : vector<4x256xf32>
      %46 = tpu.matmul %45, %38, %cst_33 {dimension_numbers = #tpu.dot_dimension_numbers<[1], [0], [0], [1], [0, 0, 1, 1], [], []>} : vector<4x4xf32>, vector<4x256xf32>, vector<4x256xf32> -> vector<4x256xf32>
      %c0_34 = arith.constant 0 : index
      %c0_35 = arith.constant 0 : index
      %47 = vector.load %arg8[%c0_34, %c0_35] : memref<4x1xf32, #tpu.memory_space<vmem>>, vector<4x1xf32>
      %48 = vector.broadcast %47 : vector<4x1xf32> to vector<4x256xf32>
      %49 = arith.addf %46, %48 : vector<4x256xf32>
      %c0_36 = arith.constant 0 : index
      %c0_37 = arith.constant 0 : index
      %50 = vector.load %arg13[%c0_36, %c0_37] : memref<4x256xf32, #tpu.memory_space<vmem>>, vector<4x256xf32>
      tpu.vector_store %arg13[%c0_36, %c0_37], %49 {strides = array<i32>} : memref<4x256xf32, #tpu.memory_space<vmem>>, vector<4x256xf32>,
    } else {
    }
    %c0 = arith.constant 0 : index
    %c0_1 = arith.constant 0 : index
    %3 = vector.load %arg12[%c0, %c0_1] : memref<4x256xf32, #tpu.memory_space<vmem>>, vector<4x256xf32>
    %c0_2 = arith.constant 0 : index
    %c0_3 = arith.constant 0 : index
    %4 = vector.load %arg13[%c0_2, %c0_3] : memref<4x256xf32, #tpu.memory_space<vmem>>, vector<4x256xf32>
    %c128_i32 = arith.constant 128 : i32
    %5 = arith.muli %arg1, %c128_i32 : i32
    %6 = tpu.assume_multiple %5, 128 : i32
    %c0_4 = arith.constant 0 : index
    %c0_5 = arith.constant 0 : index
    %7 = arith.index_cast %6 : i32 to index
    %8 = vector.load %arg2[%c0_4, %c0_5, %7] : memref<1x4x256xf32, #tpu.memory_space<vmem>>, vector<1x4x128xf32>
    %9 = vector.shape_cast %8 : vector<1x4x128xf32> to vector<4x128xf32>
    %c0_6 = arith.constant 0 : index
    %c0_7 = arith.constant 0 : index
    %10 = vector.load %arg3[%c0_6, %c0_7] : memref<4x4xf32, #tpu.memory_space<vmem>>, vector<4x4xf32>
    %cst = arith.constant dense<0.000000e+00> : vector<4x128xf32>
    %11 = tpu.matmul %10, %9, %cst {dimension_numbers = #tpu.dot_dimension_numbers<[1], [0], [0], [1], [0, 0, 1, 1], [], []>} : vector<4x4xf32>, vector<4x128xf32>, vector<4x128xf32> -> vector<4x128xf32>
    %c0_8 = arith.constant 0 : index
    %c0_9 = arith.constant 0 : index
    %12 = vector.load %arg4[%c0_8, %c0_9] : memref<4x1xf32, #tpu.memory_space<vmem>>, vector<4x1xf32>
    %13 = vector.broadcast %12 : vector<4x1xf32> to vector<4x128xf32>
    %14 = arith.addf %11, %13 : vector<4x128xf32>
    %cst_10 = arith.constant dense<0.000000e+00> : vector<128x256xf32>
    %15 = tpu.matmul %14, %3, %cst_10 {dimension_numbers = #tpu.dot_dimension_numbers<[0], [0], [1], [1], [0, 1, 1, 1], [], []>} : vector<4x128xf32>, vector<4x256xf32>, vector<128x256xf32> -> vector<128x256xf32>
    %cst_11 = arith.constant dense<0xFF800000> : vector<128xf32>
    %16 = vector.multi_reduction <maximumf>, %15, %cst_11 [1] : vector<128x256xf32> to vector<128xf32>
    %17 = vector.shape_cast %16 : vector<128xf32> to vector<128x1xf32>
    %18 = vector.broadcast %17 : vector<128x1xf32> to vector<128x256xf32>
    %19 = arith.subf %15, %18 : vector<128x256xf32>
    %20 = math.exp %19 : vector<128x256xf32>
    %cst_12 = arith.constant dense<0.000000e+00> : vector<128xf32>
    %21 = vector.multi_reduction <add>, %20, %cst_12 [1] : vector<128x256xf32> to vector<128xf32>
    %22 = vector.shape_cast %21 : vector<128xf32> to vector<128x1xf32>
    %23 = tpu.reciprocal %22 : vector<128x1xf32> -> vector<128x1xf32>
    %24 = vector.broadcast %23 : vector<128x1xf32> to vector<128x256xf32>
    %25 = arith.mulf %20, %24 : vector<128x256xf32>
    %cst_13 = arith.constant dense<0.000000e+00> : vector<4x128xf32>
    %26 = tpu.matmul %4, %25, %cst_13 {dimension_numbers = #tpu.dot_dimension_numbers<[1], [1], [0], [0], [0, 0, 1, 0], [], []>} : vector<4x256xf32>, vector<128x256xf32>, vector<4x128xf32> -> vector<4x128xf32>
    %c0_14 = arith.constant 0 : index
    %27 = memref.load %arg9[%c0_14] : memref<1xf32, #tpu.memory_space<smem>>
    %28 = vector.broadcast %27 : f32 to vector<4x128xf32>
    %29 = arith.mulf %28, %26 : vector<4x128xf32>
    %30 = arith.addf %29, %9 : vector<4x128xf32>
    %c0_15 = arith.constant 0 : index
    %c0_16 = arith.constant 0 : index
    %c0_17 = arith.constant 0 : index
    %31 = vector.load %arg10[%c0_15, %c0_16, %c0_17] : memref<1x4x128xf32, #tpu.memory_space<vmem>>, vector<1x4x128xf32>
    %32 = vector.shape_cast %31 : vector<1x4x128xf32> to vector<4x128xf32>
    %33 = vector.shape_cast %30 : vector<4x128xf32> to vector<1x4x128xf32>
    tpu.vector_store %arg10[%c0_15, %c0_16, %c0_17], %33 {strides = array<i32>} : memref<1x4x128xf32, #tpu.memory_space<vmem>>, vector<1x4x128xf32>,
    %c0_18 = arith.constant 0 : index
    %c0_19 = arith.constant 0 : index
    %c0_20 = arith.constant 0 : index
    %34 = vector.load %arg11[%c0_18, %c0_19, %c0_20] : memref<1x128x256xf32, #tpu.memory_space<vmem>>, vector<1x128x256xf32>
    %35 = vector.shape_cast %34 : vector<1x128x256xf32> to vector<128x256xf32>
    %36 = vector.shape_cast %25 : vector<128x256xf32> to vector<1x128x256xf32>
    tpu.vector_store %arg11[%c0_18, %c0_19, %c0_20], %36 {strides = array<i32>} : memref<1x128x256xf32, #tpu.memory_space<vmem>>, vector<1x128x256xf32>,
    return
  }
  func.func @transform_0(%arg0: i32, %arg1: i32) -> (i32, i32, i32) {
    %c0_i32 = arith.constant 0 : i32
    %c0_i32_0 = arith.constant 0 : i32
    %c0_i32_1 = arith.constant 0 : i32
    return %arg0, %c0_i32, %c0_i32_0 : i32, i32, i32
  }
  func.func @transform_1(%arg0: i32, %arg1: i32) -> (i32, i32) {
    %c0_i32 = arith.constant 0 : i32
    %c0_i32_0 = arith.constant 0 : i32
    %c0_i32_1 = arith.constant 0 : i32
    return %c0_i32, %c0_i32_0 : i32, i32
  }
  func.func @transform_2(%arg0: i32, %arg1: i32) -> (i32, i32) {
    %c0_i32 = arith.constant 0 : i32
    %c0_i32_0 = arith.constant 0 : i32
    %c0_i32_1 = arith.constant 0 : i32
    return %c0_i32, %c0_i32_0 : i32, i32
  }
  func.func @transform_3(%arg0: i32, %arg1: i32) -> (i32, i32) {
    %c0_i32 = arith.constant 0 : i32
    %c0_i32_0 = arith.constant 0 : i32
    %c0_i32_1 = arith.constant 0 : i32
    return %c0_i32, %c0_i32_0 : i32, i32
  }
  func.func @transform_4(%arg0: i32, %arg1: i32) -> (i32, i32) {
    %c0_i32 = arith.constant 0 : i32
    %c0_i32_0 = arith.constant 0 : i32
    %c0_i32_1 = arith.constant 0 : i32
    return %c0_i32, %c0_i32_0 : i32, i32
  }
  func.func @transform_5(%arg0: i32, %arg1: i32) -> (i32, i32) {
    %c0_i32 = arith.constant 0 : i32
    %c0_i32_0 = arith.constant 0 : i32
    %c0_i32_1 = arith.constant 0 : i32
    return %c0_i32, %c0_i32_0 : i32, i32
  }
  func.func @transform_6(%arg0: i32, %arg1: i32) -> (i32, i32) {
    %c0_i32 = arith.constant 0 : i32
    %c0_i32_0 = arith.constant 0 : i32
    %c0_i32_1 = arith.constant 0 : i32
    return %c0_i32, %c0_i32_0 : i32, i32
  }
  func.func @transform_7(%arg0: i32, %arg1: i32) -> i32 {
    %c0_i32 = arith.constant 0 : i32
    %c0_i32_0 = arith.constant 0 : i32
    return %c0_i32 : i32
  }
  func.func @transform_8(%arg0: i32, %arg1: i32) -> (i32, i32, i32) {
    %c0_i32 = arith.constant 0 : i32
    %c0_i32_0 = arith.constant 0 : i32
    return %arg0, %c0_i32, %arg1 : i32, i32, i32
  }
  func.func @transform_9(%arg0: i32, %arg1: i32) -> (i32, i32, i32) {
    %c0_i32 = arith.constant 0 : i32
    %c0_i32_0 = arith.constant 0 : i32
    return %arg0, %arg1, %c0_i32 : i32, i32, i32
  }
}

</mosaic_0001>

<llo_original>
// kernel: tpu_custom_call.1
$region0: #{tpu_custom_call.1}
  #allocation0 [shape = 'u32[]', space=smem, size = 0x4, offset = 0x4, fixed_abs, tag = 'smem constant byte address 0x4 - core index']
  #allocation1 [shape = 'u32[144,128]{1,0:T(1,128)}', space=vmem, size = 0x12000, scoped, tag = 'internal scratch']
  #allocation2 [shape = 'f32[4,256]{1,0:T(4,128)}', space=vmem, size = 0x1000, scoped, tag = 'scratch operand']
  #allocation3 [shape = 'f32[4,256]{1,0:T(4,128)}', space=vmem, size = 0x1000, scoped, tag = 'scratch operand']
  #allocation4 [shape = 'f32[1]{0:T(128)S(6)}', space=smem, size = 0x200, scoped, tag = 'scoped memory for tpu_custom_call.1']
  %s0 = inlined_call_operand.vmem [shape: f32[2,4,256], index: 0, kind: input, shape index: {}]
  %s1 = inlined_call_operand.vmem [shape: f32[4,4], index: 1, kind: input, shape index: {}]
  %s2 = inlined_call_operand.vmem [shape: f32[4,1], index: 2, kind: input, shape index: {}]
  %s3 = inlined_call_operand.vmem [shape: f32[4,4], index: 3, kind: input, shape index: {}]
  %s4 = inlined_call_operand.vmem [shape: f32[4,1], index: 4, kind: input, shape index: {}]
  %s5 = inlined_call_operand.vmem [shape: f32[4,4], index: 5, kind: input, shape index: {}]
  %s6 = inlined_call_operand.vmem [shape: f32[4,1], index: 6, kind: input, shape index: {}]
  %s7 = inlined_call_operand.<no memory space> [shape: f32[1], index: 7, kind: input, shape index: {}]
  %s8 = inlined_call_operand.hbm [shape: f32[2,4,256], index: 8, kind: output, shape index: {0}]
  %s9 = inlined_call_operand.hbm [shape: f32[2,256,256], index: 9, kind: output, shape index: {1}]
  %10 = xla_tuple %s8, %s9
  %s11 = sld [smem:[#allocation0]]
  $region77: #{tpu_custom_call.1} parent=0
    _
  %s13 = ssub.s32 1, %s11
  %s14 = scalar_select 0, %s13, %s11
  %15 = sst [smem:[#allocation4]] %s7
  $region1: #{tpu_custom_call.1} parent=0
    #allocation5 [shape = 'u8[4096]{0}', space=vmem, size = 0x1000, scoped, tag = 'output window, operand 0']
    #allocation6 [shape = 's32[2]{0}', space=sflag, size = 0x8, scoped, tag = 'scoped memory for tpu_custom_call.1']
    #allocation7 [shape = 'u8[262144]{0}', space=vmem, size = 0x40000, scoped, tag = 'output window, operand 1']
    #allocation8 [shape = 's32[2]{0}', space=sflag, size = 0x8, scoped, tag = 'scoped memory for tpu_custom_call.1']
    %16 = vsyncpa [#allocation6], 0
    %s17 = scalar_lea.sflag [#allocation6], 1
    %18 = vsyncpa %s17, 0
    %19 = vsyncpa [#allocation8], 0
    %s20 = scalar_lea.sflag [#allocation8], 1
    %21 = vsyncpa %s20, 0
    loop: start=0, step=1, limit=6
    $region2: #{tpu_custom_call.1} parent=1 // loop_pre_header
      _
    $region3: #{tpu_custom_call.1} parent=1 // loop_header
      %s23 = sphi 0, %s27
      %p24 = scmp.ge.s32.totalorder %s23, 6
      %s30 = sphi 0, %s42
      %s31 = sphi 0, %s38
      %s32 = sphi 0, %s30
      %s33 = sphi 0, %s31
      %s34 = sphi 0, %s32
      %s35 = sphi 0, %s33
      %s45 = sphi 0, %s47
      %s48 = sphi 0, %s45
      %s49 = sphi 0, %s48
      %s65 = sphi 0, %s49
      %s69 = sphi 0, %s69
      %s71 = sphi 0, %s69
      %s72 = sphi 0, %s71
      %s86 = sphi 0, %s72
      %s90 = sphi 0, %s90
      %s92 = sphi 0, %s90
      %s93 = sphi 0, %s92
      %s107 = sphi 0, %s93
      %s111 = sphi 0, %s111
      %s113 = sphi 0, %s111
      %s114 = sphi 0, %s113
      %s128 = sphi 0, %s114
      %s132 = sphi 0, %s132
      %s134 = sphi 0, %s132
      %s135 = sphi 0, %s134
      %s149 = sphi 0, %s135
      %s153 = sphi 0, %s153
      %s155 = sphi 0, %s153
      %s156 = sphi 0, %s155
      %s170 = sphi 0, %s156
      %s174 = sphi 0, %s174
      %s176 = sphi 0, %s174
      %s177 = sphi 0, %s176
      %s191 = sphi 0, %s177
      %s195 = sphi 0, %s195
      %s197 = sphi 0, %s195
      %s198 = sphi 0, %s197
      %s212 = sphi 0, %s198
      %s220 = sphi 0, %s222
      %s223 = sphi 0, %s220
      %s224 = sphi 0, %s223
      %s240 = sphi 0, %s224
      %s248 = sphi 0, %s250
      %s251 = sphi 0, %s248
      %s252 = sphi 0, %s251
      %s268 = sphi 0, %s252
    $region4: #{tpu_custom_call.1} parent=1 // loop_header_branch
      %26 = sbr.rel (%p24) target = $region8
    $region5: #{tpu_custom_call.1} parent=1 // loop_body
      %s28 = ssub.s32 %s23, 1
      %s29 = ssub.s32 %s23, 2
      %s36 = sadd.s32 1, %s31
      %p37 = scmp.ge.s32.totalorder %s36, 2
      %s38 = scalar_select %p37, 0, %s36
      %s39 = sadd.s32 1, %s30
      %s40 = scalar_select %p37, %s39, %s30
      %p41 = scmp.ge.s32.totalorder %s40, 2
      %s42 = scalar_select %p41, 0, %s40
      %s43 = ssub.s32 %s30, %s42
      %p44 = scmp.eq.s32.totalorder %s43, 0
      %s46 = sadd.s32 %s45, 1
      %s47 = scalar_select %p44, %s45, %s46
      %p50 = pneg %p44
      %p51 = scmp.eq.s32.totalorder %s23, 3
      %p52 = por %p50, %p51
      %p53 = scmp.ne.s32.totalorder %s45, %s48
      %p54 = scmp.eq.s32.totalorder %s23, 0
      %p55 = por %p53, %p54
      %p56 = scmp.ne.s32.totalorder %s45, %s48
      %p57 = scmp.eq.s32.totalorder %s28, 3
      %p58 = por %p56, %p57
      %p59 = scmp.ne.s32.totalorder %s48, %s49
      %p60 = scmp.eq.s32.totalorder %s28, 0
      %p61 = por %p59, %p60
      %p62 = scmp.ne.s32.totalorder %s48, %s49
      %p63 = scmp.eq.s32.totalorder %s29, 3
      %p64 = por %p62, %p63
      %p66 = scmp.ne.s32.totalorder %s49, %s65
      %p67 = scmp.eq.s32.totalorder %s29, 0
      %p68 = por %p66, %p67
      %s70 = sadd.s32 %s69, 1
      %p73 = scmp.eq.s32.totalorder %s23, 3
      %p74 = scmp.ne.s32.totalorder %s69, %s71
      %p75 = scmp.eq.s32.totalorder %s23, 0
      %p76 = por %p74, %p75
      %p77 = scmp.ne.s32.totalorder %s69, %s71
      %p78 = scmp.eq.s32.totalorder %s28, 3
      %p79 = por %p77, %p78
      %p80 = scmp.ne.s32.totalorder %s71, %s72
      %p81 = scmp.eq.s32.totalorder %s28, 0
      %p82 = por %p80, %p81
      %p83 = scmp.ne.s32.totalorder %s71, %s72
      %p84 = scmp.eq.s32.totalorder %s29, 3
      %p85 = por %p83, %p84
      %p87 = scmp.ne.s32.totalorder %s72, %s86
      %p88 = scmp.eq.s32.totalorder %s29, 0
      %p89 = por %p87, %p88
      %s91 = sadd.s32 %s90, 1
      %p94 = scmp.eq.s32.totalorder %s23, 3
      %p95 = scmp.ne.s32.totalorder %s90, %s92
      %p96 = scmp.eq.s32.totalorder %s23, 0
      %p97 = por %p95, %p96
      %p98 = scmp.ne.s32.totalorder %s90, %s92
      %p99 = scmp.eq.s32.totalorder %s28, 3
      %p100 = por %p98, %p99
      %p101 = scmp.ne.s32.totalorder %s92, %s93
      %p102 = scmp.eq.s32.totalorder %s28, 0
      %p103 = por %p101, %p102
      %p104 = scmp.ne.s32.totalorder %s92, %s93
      %p105 = scmp.eq.s32.totalorder %s29, 3
      %p106 = por %p104, %p105
      %p108 = scmp.ne.s32.totalorder %s93, %s107
      %p109 = scmp.eq.s32.totalorder %s29, 0
      %p110 = por %p108, %p109
      %s112 = sadd.s32 %s111, 1
      %p115 = scmp.eq.s32.totalorder %s23, 3
      %p116 = scmp.ne.s32.totalorder %s111, %s113
      %p117 = scmp.eq.s32.totalorder %s23, 0
      %p118 = por %p116, %p117
      %p119 = scmp.ne.s32.totalorder %s111, %s113
      %p120 = scmp.eq.s32.totalorder %s28, 3
      %p121 = por %p119, %p120
      %p122 = scmp.ne.s32.totalorder %s113, %s114
      %p123 = scmp.eq.s32.totalorder %s28, 0
      %p124 = por %p122, %p123
      %p125 = scmp.ne.s32.totalorder %s113, %s114
      %p126 = scmp.eq.s32.totalorder %s29, 3
      %p127 = por %p125, %p126
      %p129 = scmp.ne.s32.totalorder %s114, %s128
      %p130 = scmp.eq.s32.totalorder %s29, 0
      %p131 = por %p129, %p130
      %s133 = sadd.s32 %s132, 1
      %p136 = scmp.eq.s32.totalorder %s23, 3
      %p137 = scmp.ne.s32.totalorder %s132, %s134
      %p138 = scmp.eq.s32.totalorder %s23, 0
      %p139 = por %p137, %p138
      %p140 = scmp.ne.s32.totalorder %s132, %s134
      %p141 = scmp.eq.s32.totalorder %s28, 3
      %p142 = por %p140, %p141
      %p143 = scmp.ne.s32.totalorder %s134, %s135
      %p144 = scmp.eq.s32.totalorder %s28, 0
      %p145 = por %p143, %p144
      %p146 = scmp.ne.s32.totalorder %s134, %s135
      %p147 = scmp.eq.s32.totalorder %s29, 3
      %p148 = por %p146, %p147
      %p150 = scmp.ne.s32.totalorder %s135, %s149
      %p151 = scmp.eq.s32.totalorder %s29, 0
      %p152 = por %p150, %p151
      %s154 = sadd.s32 %s153, 1
      %p157 = scmp.eq.s32.totalorder %s23, 3
      %p158 = scmp.ne.s32.totalorder %s153, %s155
      %p159 = scmp.eq.s32.totalorder %s23, 0
      %p160 = por %p158, %p159
      %p161 = scmp.ne.s32.totalorder %s153, %s155
      %p162 = scmp.eq.s32.totalorder %s28, 3
      %p163 = por %p161, %p162
      %p164 = scmp.ne.s32.totalorder %s155, %s156
      %p165 = scmp.eq.s32.totalorder %s28, 0
      %p166 = por %p164, %p165
      %p167 = scmp.ne.s32.totalorder %s155, %s156
      %p168 = scmp.eq.s32.totalorder %s29, 3
      %p169 = por %p167, %p168
      %p171 = scmp.ne.s32.totalorder %s156, %s170
      %p172 = scmp.eq.s32.totalorder %s29, 0
      %p173 = por %p171, %p172
      %s175 = sadd.s32 %s174, 1
      %p178 = scmp.eq.s32.totalorder %s23, 3
      %p179 = scmp.ne.s32.totalorder %s174, %s176
      %p180 = scmp.eq.s32.totalorder %s23, 0
      %p181 = por %p179, %p180
      %p182 = scmp.ne.s32.totalorder %s174, %s176
      %p183 = scmp.eq.s32.totalorder %s28, 3
      %p184 = por %p182, %p183
      %p185 = scmp.ne.s32.totalorder %s176, %s177
      %p186 = scmp.eq.s32.totalorder %s28, 0
      %p187 = por %p185, %p186
      %p188 = scmp.ne.s32.totalorder %s176, %s177
      %p189 = scmp.eq.s32.totalorder %s29, 3
      %p190 = por %p188, %p189
      %p192 = scmp.ne.s32.totalorder %s177, %s191
      %p193 = scmp.eq.s32.totalorder %s29, 0
      %p194 = por %p192, %p193
      %s196 = sadd.s32 %s195, 1
      %p199 = scmp.eq.s32.totalorder %s23, 3
      %p200 = scmp.ne.s32.totalorder %s195, %s197
      %p201 = scmp.eq.s32.totalorder %s23, 0
      %p202 = por %p200, %p201
      %p203 = scmp.ne.s32.totalorder %s195, %s197
      %p204 = scmp.eq.s32.totalorder %s28, 3
      %p205 = por %p203, %p204
      %p206 = scmp.ne.s32.totalorder %s197, %s198
      %p207 = scmp.eq.s32.totalorder %s28, 0
      %p208 = por %p206, %p207
      %p209 = scmp.ne.s32.totalorder %s197, %s198
      %p210 = scmp.eq.s32.totalorder %s29, 3
      %p211 = por %p209, %p210
      %p213 = scmp.ne.s32.totalorder %s198, %s212
      %p214 = scmp.eq.s32.totalorder %s29, 0
      %p215 = por %p213, %p214
      %s216 = ssub.s32 %s30, %s42
      %s217 = ssub.s32 %s31, %s38
      %s218 = sor.u32 %s216, %s217
      %p219 = scmp.eq.s32.totalorder %s218, 0
      %s221 = sadd.s32 %s220, 1
      %s222 = scalar_select %p219, %s220, %s221
      %p225 = pneg %p219
      %p226 = scmp.eq.s32.totalorder %s23, 3
      %p227 = por %p225, %p226
      %p228 = scmp.ne.s32.totalorder %s220, %s223
      %p229 = scmp.eq.s32.totalorder %s23, 0
      %p230 = por %p228, %p229
      %p231 = scmp.ne.s32.totalorder %s220, %s223
      %p232 = scmp.eq.s32.totalorder %s28, 3
      %p233 = por %p231, %p232
      %p234 = scmp.ne.s32.totalorder %s223, %s224
      %p235 = scmp.eq.s32.totalorder %s28, 0
      %p236 = por %p234, %p235
      %p237 = scmp.ne.s32.totalorder %s223, %s224
      %p238 = scmp.eq.s32.totalorder %s29, 3
      %p239 = por %p237, %p238
      %p241 = scmp.ne.s32.totalorder %s224, %s240
      %p242 = scmp.eq.s32.totalorder %s29, 0
      %p243 = por %p241, %p242
      %s244 = ssub.s32 %s30, %s42
      %s245 = ssub.s32 %s31, %s38
      %s246 = sor.u32 %s244, %s245
      %p247 = scmp.eq.s32.totalorder %s246, 0
      %s249 = sadd.s32 %s248, 1
      %s250 = scalar_select %p247, %s248, %s249
      %p253 = pneg %p247
      %p254 = scmp.eq.s32.totalorder %s23, 3
      %p255 = por %p253, %p254
      %p256 = scmp.ne.s32.totalorder %s248, %s251
      %p257 = scmp.eq.s32.totalorder %s23, 0
      %p258 = por %p256, %p257
      %p259 = scmp.ne.s32.totalorder %s248, %s251
      %p260 = scmp.eq.s32.totalorder %s28, 3
      %p261 = por %p259, %p260
      %p262 = scmp.ne.s32.totalorder %s251, %s252
      %p263 = scmp.eq.s32.totalorder %s28, 0
      %p264 = por %p262, %p263
      %p265 = scmp.ne.s32.totalorder %s251, %s252
      %p266 = scmp.eq.s32.totalorder %s29, 3
      %p267 = por %p265, %p266
      %p269 = scmp.ne.s32.totalorder %s252, %s268
      %p270 = scmp.eq.s32.totalorder %s29, 0
      %p271 = por %p269, %p270
      %p272 = scmp.le.s32.totalorder 1, %s23
      %p273 = scmp.lt.s32.totalorder %s23, 5
      %p274 = pnand %p272, %p273
      %p275 = pneg %p274
      // Predicated region
      $region9: #{tpu_custom_call.1} parent=5 // pred_check
        _
      $region10: #{tpu_custom_call.1} parent=5 // pred_check_branch
        %277 = sbr.rel (%p274) target = $region12
      $region11: #{tpu_custom_call.1} parent=5 // pred_region
        %s278 = ssub.s32 %s23, 1
        // Predicated region
        $region13: #{tpu_custom_call.1} parent=11 // pred_check
          %p279 = pneg %p82
        $region14: #{tpu_custom_call.1} parent=11 // pred_check_branch
          %281 = sbr.rel (%p279) target = $region16
        $region15: #{tpu_custom_call.1} parent=11 // pred_region
          _
        $region16: #{tpu_custom_call.1} parent=11 // pred_fallthru
          _
        // Predicated region
        $region17: #{tpu_custom_call.1} parent=11 // pred_check
          %p282 = pneg %p103
        $region18: #{tpu_custom_call.1} parent=11 // pred_check_branch
          %284 = sbr.rel (%p282) target = $region20
        $region19: #{tpu_custom_call.1} parent=11 // pred_region
          _
        $region20: #{tpu_custom_call.1} parent=11 // pred_fallthru
          _
        // Predicated region
        $region21: #{tpu_custom_call.1} parent=11 // pred_check
          %p285 = pneg %p124
        $region22: #{tpu_custom_call.1} parent=11 // pred_check_branch
          %287 = sbr.rel (%p285) target = $region24
        $region23: #{tpu_custom_call.1} parent=11 // pred_region
          _
        $region24: #{tpu_custom_call.1} parent=11 // pred_fallthru
          _
        // Predicated region
        $region25: #{tpu_custom_call.1} parent=11 // pred_check
          %p288 = pneg %p145
        $region26: #{tpu_custom_call.1} parent=11 // pred_check_branch
          %290 = sbr.rel (%p288) target = $region28
        $region27: #{tpu_custom_call.1} parent=11 // pred_region
          _
        $region28: #{tpu_custom_call.1} parent=11 // pred_fallthru
          _
        // Predicated region
        $region29: #{tpu_custom_call.1} parent=11 // pred_check
          %p291 = pneg %p166
        $region30: #{tpu_custom_call.1} parent=11 // pred_check_branch
          %293 = sbr.rel (%p291) target = $region32
        $region31: #{tpu_custom_call.1} parent=11 // pred_region
          _
        $region32: #{tpu_custom_call.1} parent=11 // pred_fallthru
          _
        // Predicated region
        $region33: #{tpu_custom_call.1} parent=11 // pred_check
          %p294 = pneg %p187
        $region34: #{tpu_custom_call.1} parent=11 // pred_check_branch
          %296 = sbr.rel (%p294) target = $region36
        $region35: #{tpu_custom_call.1} parent=11 // pred_region
          _
        $region36: #{tpu_custom_call.1} parent=11 // pred_fallthru
          _
        // Predicated region
        $region37: #{tpu_custom_call.1} parent=11 // pred_check
          %p297 = pneg %p208
        $region38: #{tpu_custom_call.1} parent=11 // pred_check_branch
          %299 = sbr.rel (%p297) target = $region40
        $region39: #{tpu_custom_call.1} parent=11 // pred_region
          _
        $region40: #{tpu_custom_call.1} parent=11 // pred_fallthru
          _
      $region12: #{tpu_custom_call.1} parent=5 // pred_fallthru
        _
      %p300 = scmp.lt.s32.totalorder %s23, 4
      // Predicated region
      $region41: #{tpu_custom_call.1} parent=5 // pred_check
        %p301 = pneg %p300
      $region42: #{tpu_custom_call.1} parent=5 // pred_check_branch
        %303 = sbr.rel (%p301) target = $region44
      $region43: #{tpu_custom_call.1} parent=5 // pred_region
        // Predicated region
        $region45: #{tpu_custom_call.1} parent=43 // pred_check
          %p304 = pneg %p55
        $region46: #{tpu_custom_call.1} parent=43 // pred_check_branch
          %306 = sbr.rel (%p304) target = $region48
        $region47: #{tpu_custom_call.1} parent=43 // pred_region
          %p307 = scmp.lt.s32.totalorder %s30, 1
          %s308 = scalar_select %p307, %s30, 1
          %s309 = smul.addr %s308, 2
          %s310 = smul.addr %s309, 4
          %s311 = scalar_lea.vmem %s0, %s310
        $region48: #{tpu_custom_call.1} parent=43 // pred_fallthru
          _
      $region44: #{tpu_custom_call.1} parent=5 // pred_fallthru
        _
      %p312 = scmp.le.s32.totalorder 1, %s23
      %p313 = scmp.lt.s32.totalorder %s23, 5
      %p314 = pnand %p312, %p313
      %p315 = pneg %p314
      // Predicated region
      $region49: #{tpu_custom_call.1} parent=5 // pred_check
        _
      $region50: #{tpu_custom_call.1} parent=5 // pred_check_branch
        %317 = sbr.rel (%p314) target = $region52
      $region51: #{tpu_custom_call.1} parent=5 // pred_region
        %s318 = ssub.s32 %s23, 1
        %p319 = scmp.lt.s32.totalorder %s32, 1
        %s320 = scalar_select %p319, %s32, 1
        %s321 = smul.addr %s320, 2
        %s322 = smul.addr %s321, 4
        %s323 = scalar_lea.vmem %s0, %s322
        %p324 = pneg %p61
        %p325 = pneg %p58
        %p326 = pneg %p82
        %p327 = pneg %p79
        %p328 = pneg %p103
        %p329 = pneg %p100
        %p330 = pneg %p124
        %p331 = pneg %p121
        %p332 = pneg %p145
        %p333 = pneg %p142
        %p334 = pneg %p166
        %p335 = pneg %p163
        %p336 = pneg %p187
        %p337 = pneg %p184
        %p338 = pneg %p208
        %p339 = pneg %p205
        %p340 = pneg %p236
        %p341 = pneg %p233
        %s342 = sand.u32 %s223, 1
        %s343 = scalar_lea.sflag [#allocation6], %s342
        %s344 = sand.u32 %s223, 1
        %s345 = smul.addr %s344, 4
        %s346 = scalar_lea.vmem [#allocation5], %s345
        %p347 = pneg %p264
        %p348 = pneg %p261
        %s349 = sand.u32 %s251, 1
        %s350 = scalar_lea.sflag [#allocation8], %s349
        %s351 = sand.u32 %s251, 1
        %s352 = smul.addr %s351, 256
        %s353 = scalar_lea.vmem [#allocation7], %s352
        %p354 = scmp.lt.s32.totalorder %s32, 1
        %s355 = scalar_select %p354, %s32, 1
        %s356 = smul.addr %s355, 2
        %s357 = smul.addr %s356, 4
        %s358 = scalar_lea.vmem %s0, %s357
        %s359 = smul.u32 16, %s33
        %p360 = scmp.eq.s32.totalorder %s33, 0
        // Predicated region
        $region53: #{tpu_custom_call.1} parent=51 // pred_check
          %p361 = pneg %p360
        $region54: #{tpu_custom_call.1} parent=51 // pred_check_branch
          %363 = sbr.rel (%p361) target = $region56
        $region55: #{tpu_custom_call.1} parent=51 // pred_region
          %v364 = vld [vmem:[%s358] sm:$0xff]
          %v365 = vld [vmem:[%s3] sm:$0xf]
          %v366 = vld [vmem:[%s4] sm:$0xf]
          %368 = vset.pattern.permute.xlu0 0
          %369 = vperm.xlu0 %368, %v366
          %v370 = vpop.permute.xlu0 %369
          %v373 = vcombine.high %v364, %v364
          %vm374 = vcmask 31744
          %v376 = vsel %vm374, %v365, 0
          %vm378 = vcmask 1043456
          %v379 = vsel %vm378, %v364, 0
          %v381 = vsel %vm378, %v373, 0
          %383 = vmatprep.subr.mxu0 %v381
          %384 = vmatpush1.msra.mxu0 %v379
          %385 = vmatprep.subr.mxu0 0.0
          %386 = vmatpush1.msra.mxu0 0.0
          %387 = vmatprep.subr.mxu0 0.0
          %388 = vmatpush1.msra.mxu0 0.0
          %389 = vmatprep.subr.mxu0 0.0
          %390 = vmatpush1.msra.mxu0 0.0
          %391 = vmatprep.subr.mxu0 0.0
          %392 = vmatpush1.msra.mxu0 0.0
          %393 = vmatprep.subr.mxu0 0.0
          %394 = vmatpush1.msra.mxu0 0.0
          %395 = vmatprep.subr.mxu0 0.0
          %396 = vmatpush1.msra.mxu0 0.0
          %397 = vmatprep.subr.mxu0 0.0
          %398 = vmatpush1.msra.mxu0 0.0
          %399 = vmatprep.subr.mxu0 0.0
          %400 = vmatpush1.msra.mxu0 0.0
          %401 = vmatprep.subr.mxu0 0.0
          %402 = vmatpush1.msra.mxu0 0.0
          %403 = vmatprep.subr.mxu0 0.0
          %404 = vmatpush1.msra.mxu0 0.0
          %405 = vmatprep.subr.mxu0 0.0
          %406 = vmatpush1.msra.mxu0 0.0
          %407 = vmatprep.subr.mxu0 0.0
          %408 = vmatpush1.msra.mxu0 0.0
          %409 = vmatprep.subr.mxu0 0.0
          %410 = vmatpush1.msra.mxu0 0.0
          %411 = vmatprep.subr.mxu0 0.0
          %412 = vmatpush1.msra.mxu0 0.0
          %413 = vmatprep.subr.mxu0 0.0
          %414 = vmatpush1.msra.mxu0 0.0
          %415 = vmatprep.subr.mxu0 0.0
          %416 = vmatpush1.msra.mxu0 0.0
          %417 = vmatprep.subr.mxu0 0.0
          %418 = vmatpush1.msra.mxu0 0.0
          %419 = vmatprep.subr.mxu0 0.0
          %420 = vmatpush1.msra.mxu0 0.0
          %421 = vmatprep.subr.mxu0 0.0
          %422 = vmatpush1.msra.mxu0 0.0
          %423 = vmatprep.subr.mxu0 0.0
          %424 = vmatpush1.msra.mxu0 0.0
          %425 = vmatprep.subr.mxu0 0.0
          %426 = vmatpush1.msra.mxu0 0.0
          %427 = vmatprep.subr.mxu0 0.0
          %428 = vmatpush1.msra.mxu0 0.0
          %429 = vmatprep.subr.mxu0 0.0
          %430 = vmatpush1.msra.mxu0 0.0
          %431 = vmatprep.subr.mxu0 0.0
          %432 = vmatpush1.msra.mxu0 0.0
          %433 = vmatprep.subr.mxu0 0.0
          %434 = vmatpush1.msra.mxu0 0.0
          %435 = vmatprep.subr.mxu0 0.0
          %436 = vmatpush1.msra.mxu0 0.0
          %437 = vmatprep.subr.mxu0 0.0
          %438 = vmatpush1.msra.mxu0 0.0
          %439 = vmatprep.subr.mxu0 0.0
          %440 = vmatpush1.msra.mxu0 0.0
          %441 = vmatprep.subr.mxu0 0.0
          %442 = vmatpush1.msra.mxu0 0.0
          %443 = vmatprep.subr.mxu0 0.0
          %444 = vmatpush1.msra.mxu0 0.0
          %445 = vmatprep.subr.mxu0 0.0
          %446 = vmatpush1.msra.mxu0 0.0
          %447 = vmatprep.mubr.f32.mxu0 0.0
          %448 = vmatmul.mubr.f32.gmra.mrb[0].mxu0 %v376
          %v449 = vpop.f32.mrb[0].mxu0
          %v450 = vadd.f32 %v370, %v449
          %v451 = vpop.f32.mrb[0].mxu0
          %v452 = vadd.f32 %v370, %v451
          %453 = vdwg.mxu0
          %v456 = vcombine.low %v450, %v452
          %458 = vst [vmem:[#allocation2] sm:$0xff] %v456
          %v459 = vld [vmem:[%s5] sm:$0xf]
          %v460 = vld [vmem:[%s6] sm:$0xf]
          %462 = vset.pattern.permute.xlu0 0
          %463 = vperm.xlu0 %462, %v460
          %v464 = vpop.permute.xlu0 %463
          %v467 = vsel %vm374, %v459, 0
          %469 = vmatprep.subr.mxu0 %v381
          %470 = vmatpush1.msra.mxu0 %v379
          %471 = vmatprep.subr.mxu0 0.0
          %472 = vmatpush1.msra.mxu0 0.0
          %473 = vmatprep.subr.mxu0 0.0
          %474 = vmatpush1.msra.mxu0 0.0
          %475 = vmatprep.subr.mxu0 0.0
          %476 = vmatpush1.msra.mxu0 0.0
          %477 = vmatprep.subr.mxu0 0.0
          %478 = vmatpush1.msra.mxu0 0.0
          %479 = vmatprep.subr.mxu0 0.0
          %480 = vmatpush1.msra.mxu0 0.0
          %481 = vmatprep.subr.mxu0 0.0
          %482 = vmatpush1.msra.mxu0 0.0
          %483 = vmatprep.subr.mxu0 0.0
          %484 = vmatpush1.msra.mxu0 0.0
          %485 = vmatprep.subr.mxu0 0.0
          %486 = vmatpush1.msra.mxu0 0.0
          %487 = vmatprep.subr.mxu0 0.0
          %488 = vmatpush1.msra.mxu0 0.0
          %489 = vmatprep.subr.mxu0 0.0
          %490 = vmatpush1.msra.mxu0 0.0
          %491 = vmatprep.subr.mxu0 0.0
          %492 = vmatpush1.msra.mxu0 0.0
          %493 = vmatprep.subr.mxu0 0.0
          %494 = vmatpush1.msra.mxu0 0.0
          %495 = vmatprep.subr.mxu0 0.0
          %496 = vmatpush1.msra.mxu0 0.0
          %497 = vmatprep.subr.mxu0 0.0
          %498 = vmatpush1.msra.mxu0 0.0
          %499 = vmatprep.subr.mxu0 0.0
          %500 = vmatpush1.msra.mxu0 0.0
          %501 = vmatprep.subr.mxu0 0.0
          %502 = vmatpush1.msra.mxu0 0.0
          %503 = vmatprep.subr.mxu0 0.0
          %504 = vmatpush1.msra.mxu0 0.0
          %505 = vmatprep.subr.mxu0 0.0
          %506 = vmatpush1.msra.mxu0 0.0
          %507 = vmatprep.subr.mxu0 0.0
          %508 = vmatpush1.msra.mxu0 0.0
          %509 = vmatprep.subr.mxu0 0.0
          %510 = vmatpush1.msra.mxu0 0.0
          %511 = vmatprep.subr.mxu0 0.0
          %512 = vmatpush1.msra.mxu0 0.0
          %513 = vmatprep.subr.mxu0 0.0
          %514 = vmatpush1.msra.mxu0 0.0
          %515 = vmatprep.subr.mxu0 0.0
          %516 = vmatpush1.msra.mxu0 0.0
          %517 = vmatprep.subr.mxu0 0.0
          %518 = vmatpush1.msra.mxu0 0.0
          %519 = vmatprep.subr.mxu0 0.0
          %520 = vmatpush1.msra.mxu0 0.0
          %521 = vmatprep.subr.mxu0 0.0
          %522 = vmatpush1.msra.mxu0 0.0
          %523 = vmatprep.subr.mxu0 0.0
          %524 = vmatpush1.msra.mxu0 0.0
          %525 = vmatprep.subr.mxu0 0.0
          %526 = vmatpush1.msra.mxu0 0.0
          %527 = vmatprep.subr.mxu0 0.0
          %528 = vmatpush1.msra.mxu0 0.0
          %529 = vmatprep.subr.mxu0 0.0
          %530 = vmatpush1.msra.mxu0 0.0
          %531 = vmatprep.subr.mxu0 0.0
          %532 = vmatpush1.msra.mxu0 0.0
          %533 = vmatprep.mubr.f32.mxu0 0.0
          %534 = vmatmul.mubr.f32.gmra.mrb[0].mxu0 %v467
          %v535 = vpop.f32.mrb[0].mxu0
          %v536 = vadd.f32 %v464, %v535
          %v537 = vpop.f32.mrb[0].mxu0
          %v538 = vadd.f32 %v464, %v537
          %539 = vdwg.mxu0
          %v542 = vcombine.low %v536, %v538
          %544 = vst [vmem:[#allocation3] sm:$0xff] %v542
        $region56: #{tpu_custom_call.1} parent=51 // pred_fallthru
          _
        %v545 = vld [vmem:[#allocation2] sm:$0xff]
        %v546 = vld [vmem:[#allocation3] sm:$0xff]
        %s547 = smul.u32 %s33, 128
        %s548 = sshra.s32 %s547, 7
        %s549 = sand.u32 %s547, 127
        %s550 = smul.addr %s548, 4
        %s551 = scalar_lea.vmem %s358, %s550
        %v552 = vld [vmem:[%s551] sm:$0xf]
        %v553 = vld [vmem:[%s1] sm:$0xf]
        %v554 = vld [vmem:[%s2] sm:$0xf]
        %556 = vset.pattern.permute.xlu0 0
        %557 = vperm.xlu0 %556, %v554
        %v558 = vpop.permute.xlu0 %557
        %vm560 = vcmask 31744
        %v562 = vsel %vm560, %v553, 0
        %vm564 = vcmask 1043456
        %v566 = vsel %vm564, %v552, 0
        %568 = vmatprep.subr.mxu0 0.0
        %569 = vmatpush1.msra.mxu0 %v566
        %570 = vmatprep.subr.mxu0 0.0
        %571 = vmatpush1.msra.mxu0 0.0
        %572 = vmatprep.subr.mxu0 0.0
        %573 = vmatpush1.msra.mxu0 0.0
        %574 = vmatprep.subr.mxu0 0.0
        %575 = vmatpush1.msra.mxu0 0.0
        %576 = vmatprep.subr.mxu0 0.0
        %577 = vmatpush1.msra.mxu0 0.0
        %578 = vmatprep.subr.mxu0 0.0
        %579 = vmatpush1.msra.mxu0 0.0
        %580 = vmatprep.subr.mxu0 0.0
        %581 = vmatpush1.msra.mxu0 0.0
        %582 = vmatprep.subr.mxu0 0.0
        %583 = vmatpush1.msra.mxu0 0.0
        %584 = vmatprep.subr.mxu0 0.0
        %585 = vmatpush1.msra.mxu0 0.0
        %586 = vmatprep.subr.mxu0 0.0
        %587 = vmatpush1.msra.mxu0 0.0
        %588 = vmatprep.subr.mxu0 0.0
        %589 = vmatpush1.msra.mxu0 0.0
        %590 = vmatprep.subr.mxu0 0.0
        %591 = vmatpush1.msra.mxu0 0.0
        %592 = vmatprep.subr.mxu0 0.0
        %593 = vmatpush1.msra.mxu0 0.0
        %594 = vmatprep.subr.mxu0 0.0
        %595 = vmatpush1.msra.mxu0 0.0
        %596 = vmatprep.subr.mxu0 0.0
        %597 = vmatpush1.msra.mxu0 0.0
        %598 = vmatprep.subr.mxu0 0.0
        %599 = vmatpush1.msra.mxu0 0.0
        %600 = vmatprep.subr.mxu0 0.0
        %601 = vmatpush1.msra.mxu0 0.0
        %602 = vmatprep.subr.mxu0 0.0
        %603 = vmatpush1.msra.mxu0 0.0
        %604 = vmatprep.subr.mxu0 0.0
        %605 = vmatpush1.msra.mxu0 0.0
        %606 = vmatprep.subr.mxu0 0.0
        %607 = vmatpush1.msra.mxu0 0.0
        %608 = vmatprep.subr.mxu0 0.0
        %609 = vmatpush1.msra.mxu0 0.0
        %610 = vmatprep.subr.mxu0 0.0
        %611 = vmatpush1.msra.mxu0 0.0
        %612 = vmatprep.subr.mxu0 0.0
        %613 = vmatpush1.msra.mxu0 0.0
        %614 = vmatprep.subr.mxu0 0.0
        %615 = vmatpush1.msra.mxu0 0.0
        %616 = vmatprep.subr.mxu0 0.0
        %617 = vmatpush1.msra.mxu0 0.0
        %618 = vmatprep.subr.mxu0 0.0
        %619 = vmatpush1.msra.mxu0 0.0
        %620 = vmatprep.subr.mxu0 0.0
        %621 = vmatpush1.msra.mxu0 0.0
        %622 = vmatprep.subr.mxu0 0.0
        %623 = vmatpush1.msra.mxu0 0.0
        %624 = vmatprep.subr.mxu0 0.0
        %625 = vmatpush1.msra.mxu0 0.0
        %626 = vmatprep.subr.mxu0 0.0
        %627 = vmatpush1.msra.mxu0 0.0
        %628 = vmatprep.subr.mxu0 0.0
        %629 = vmatpush1.msra.mxu0 0.0
        %630 = vmatprep.subr.mxu0 0.0
        %631 = vmatpush1.msra.mxu0 0.0
        %632 = vmatprep.mubr.f32.mxu0 0.0
        %633 = vmatmul.mubr.f32.gmra.mrb[0].mxu0 %v562
        %v634 = vpop.f32.mrb[0].mxu0
        %v635 = vadd.f32 %v558, %v634
        %v636 = vpop.f32.mrb[0].mxu0
        %637 = vdwg.mxu0
        %638 = vxpose.xlu0.b32.start [1/16] %v635, 128
        %639 = vxpose.xlu0.b32.cont [2/16] 0.0, 128
        %640 = vxpose.xlu0.b32.cont [3/16] 0.0, 128
        %641 = vxpose.xlu0.b32.cont [4/16] 0.0, 128
        %642 = vxpose.xlu0.b32.cont [5/16] 0.0, 128
        %643 = vxpose.xlu0.b32.cont [6/16] 0.0, 128
        %644 = vxpose.xlu0.b32.cont [7/16] 0.0, 128
        %645 = vxpose.xlu0.b32.cont [8/16] 0.0, 128
        %646 = vxpose.xlu0.b32.cont [9/16] 0.0, 128
        %647 = vxpose.xlu0.b32.cont [10/16] 0.0, 128
        %648 = vxpose.xlu0.b32.cont [11/16] 0.0, 128
        %649 = vxpose.xlu0.b32.cont [12/16] 0.0, 128
        %650 = vxpose.xlu0.b32.cont [13/16] 0.0, 128
        %651 = vxpose.xlu0.b32.cont [14/16] 0.0, 128
        %652 = vxpose.xlu0.b32.cont [15/16] 0.0, 128
        %653 = vxpose.xlu0.b32.end [16/16] 0.0, 128
        %v654 = vpop.trf.xlu0
        %v655 = vpop.trf.xlu0
        %v656 = vpop.trf.xlu0
        %v657 = vpop.trf.xlu0
        %v658 = vpop.trf.xlu0
        %v659 = vpop.trf.xlu0
        %v660 = vpop.trf.xlu0
        %v661 = vpop.trf.xlu0
        %v662 = vpop.trf.xlu0
        %v663 = vpop.trf.xlu0
        %v664 = vpop.trf.xlu0
        %v665 = vpop.trf.xlu0
        %v666 = vpop.trf.xlu0
        %v667 = vpop.trf.xlu0
        %v668 = vpop.trf.xlu0
        %v669 = vpop.trf.xlu0
        %v671 = vcombine.high %v545, %v545
        %v673 = vsel %vm560, %v654, 0
        %v676 = vsel %vm560, %v655, 0
        %v679 = vsel %vm560, %v656, 0
        %v682 = vsel %vm560, %v657, 0
        %v685 = vsel %vm560, %v658, 0
        %v688 = vsel %vm560, %v659, 0
        %v691 = vsel %vm560, %v660, 0
        %v694 = vsel %vm560, %v661, 0
        %v697 = vsel %vm560, %v662, 0
        %v700 = vsel %vm560, %v663, 0
        %v703 = vsel %vm560, %v664, 0
        %v706 = vsel %vm560, %v665, 0
        %v709 = vsel %vm560, %v666, 0
        %v712 = vsel %vm560, %v667, 0
        %v715 = vsel %vm560, %v668, 0
        %v718 = vsel %vm560, %v669, 0
        %v720 = vsel %vm564, %v545, 0
        %v722 = vsel %vm564, %v671, 0
        %724 = vmatprep.subr.mxu0 %v722
        %725 = vmatpush1.msra.mxu0 %v720
        %726 = vmatprep.subr.mxu0 0.0
        %727 = vmatpush1.msra.mxu0 0.0
        %728 = vmatprep.subr.mxu0 0.0
        %729 = vmatpush1.msra.mxu0 0.0
        %730 = vmatprep.subr.mxu0 0.0
        %731 = vmatpush1.msra.mxu0 0.0
        %732 = vmatprep.subr.mxu0 0.0
        %733 = vmatpush1.msra.mxu0 0.0
        %734 = vmatprep.subr.mxu0 0.0
        %735 = vmatpush1.msra.mxu0 0.0
        %736 = vmatprep.subr.mxu0 0.0
        %737 = vmatpush1.msra.mxu0 0.0
        %738 = vmatprep.subr.mxu0 0.0
        %739 = vmatpush1.msra.mxu0 0.0
        %740 = vmatprep.subr.mxu0 0.0
        %741 = vmatpush1.msra.mxu0 0.0
        %742 = vmatprep.subr.mxu0 0.0
        %743 = vmatpush1.msra.mxu0 0.0
        %744 = vmatprep.subr.mxu0 0.0
        %745 = vmatpush1.msra.mxu0 0.0
        %746 = vmatprep.subr.mxu0 0.0
        %747 = vmatpush1.msra.mxu0 0.0
        %748 = vmatprep.subr.mxu0 0.0
        %749 = vmatpush1.msra.mxu0 0.0
        %750 = vmatprep.subr.mxu0 0.0
        %751 = vmatpush1.msra.mxu0 0.0
        %752 = vmatprep.subr.mxu0 0.0
        %753 = vmatpush1.msra.mxu0 0.0
        %754 = vmatprep.subr.mxu0 0.0
        %755 = vmatpush1.msra.mxu0 0.0
        %756 = vmatprep.subr.mxu0 0.0
        %757 = vmatpush1.msra.mxu0 0.0
        %758 = vmatprep.subr.mxu0 0.0
        %759 = vmatpush1.msra.mxu0 0.0
        %760 = vmatprep.subr.mxu0 0.0
        %761 = vmatpush1.msra.mxu0 0.0
        %762 = vmatprep.subr.mxu0 0.0
        %763 = vmatpush1.msra.mxu0 0.0
        %764 = vmatprep.subr.mxu0 0.0
        %765 = vmatpush1.msra.mxu0 0.0
        %766 = vmatprep.subr.mxu0 0.0
        %767 = vmatpush1.msra.mxu0 0.0
        %768 = vmatprep.subr.mxu0 0.0
        %769 = vmatpush1.msra.mxu0 0.0
        %770 = vmatprep.subr.mxu0 0.0
        %771 = vmatpush1.msra.mxu0 0.0
        %772 = vmatprep.subr.mxu0 0.0
        %773 = vmatpush1.msra.mxu0 0.0
        %774 = vmatprep.subr.mxu0 0.0
        %775 = vmatpush1.msra.mxu0 0.0
        %776 = vmatprep.subr.mxu0 0.0
        %777 = vmatpush1.msra.mxu0 0.0
        %778 = vmatprep.subr.mxu0 0.0
        %779 = vmatpush1.msra.mxu0 0.0
        %780 = vmatprep.subr.mxu0 0.0
        %781 = vmatpush1.msra.mxu0 0.0
        %782 = vmatprep.subr.mxu0 0.0
        %783 = vmatpush1.msra.mxu0 0.0
        %784 = vmatprep.subr.mxu0 0.0
        %785 = vmatpush1.msra.mxu0 0.0
        %786 = vmatprep.subr.mxu0 0.0
        %787 = vmatpush1.msra.mxu0 0.0
        %788 = vmatprep.mubr.f32.mxu0 0.0
        %789 = vmatmul.mubr.f32.gmra.mrb[0].mxu0 %v673
        %v790 = vpop.f32.mrb[0].mxu0
        %v791 = vadd.f32 0.0, %v790
        %v792 = vpop.f32.mrb[0].mxu0
        %v793 = vadd.f32 0.0, %v792
        %794 = vmatprep.mubr.f32.mxu0 0.0
        %795 = vmatmul.mubr.f32.gmra.mrb[0].mxu0 %v676
        %v796 = vpop.f32.mrb[0].mxu0
        %v797 = vadd.f32 0.0, %v796
        %v798 = vpop.f32.mrb[0].mxu0
        %v799 = vadd.f32 0.0, %v798
        %800 = vmatprep.mubr.f32.mxu0 0.0
        %801 = vmatmul.mubr.f32.gmra.mrb[0].mxu0 %v679
        %v802 = vpop.f32.mrb[0].mxu0
        %v803 = vadd.f32 0.0, %v802
        %v804 = vpop.f32.mrb[0].mxu0
        %v805 = vadd.f32 0.0, %v804
        %806 = vmatprep.mubr.f32.mxu0 0.0
        %807 = vmatmul.mubr.f32.gmra.mrb[0].mxu0 %v682
        %v808 = vpop.f32.mrb[0].mxu0
        %v809 = vadd.f32 0.0, %v808
        %v810 = vpop.f32.mrb[0].mxu0
        %v811 = vadd.f32 0.0, %v810
        %812 = vmatprep.mubr.f32.mxu0 0.0
        %813 = vmatmul.mubr.f32.gmra.mrb[0].mxu0 %v685
        %v814 = vpop.f32.mrb[0].mxu0
        %v815 = vadd.f32 0.0, %v814
        %v816 = vpop.f32.mrb[0].mxu0
        %v817 = vadd.f32 0.0, %v816
        %818 = vmatprep.mubr.f32.mxu0 0.0
        %819 = vmatmul.mubr.f32.gmra.mrb[0].mxu0 %v688
        %v820 = vpop.f32.mrb[0].mxu0
        %v821 = vadd.f32 0.0, %v820
        %v822 = vpop.f32.mrb[0].mxu0
        %v823 = vadd.f32 0.0, %v822
        %824 = vmatprep.mubr.f32.mxu0 0.0
        %825 = vmatmul.mubr.f32.gmra.mrb[0].mxu0 %v691
        %v826 = vpop.f32.mrb[0].mxu0
        %v827 = vadd.f32 0.0, %v826
        %v828 = vpop.f32.mrb[0].mxu0
        %v829 = vadd.f32 0.0, %v828
        %830 = vmatprep.mubr.f32.mxu0 0.0
        %831 = vmatmul.mubr.f32.gmra.mrb[0].mxu0 %v694
        %v832 = vpop.f32.mrb[0].mxu0
        %v833 = vadd.f32 0.0, %v832
        %v834 = vpop.f32.mrb[0].mxu0
        %v835 = vadd.f32 0.0, %v834
        %836 = vmatprep.mubr.f32.mxu0 0.0
        %837 = vmatmul.mubr.f32.gmra.mrb[0].mxu0 %v697
        %v838 = vpop.f32.mrb[0].mxu0
        %v839 = vadd.f32 0.0, %v838
        %v840 = vpop.f32.mrb[0].mxu0
        %v841 = vadd.f32 0.0, %v840
        %842 = vmatprep.mubr.f32.mxu0 0.0
        %843 = vmatmul.mubr.f32.gmra.mrb[0].mxu0 %v700
        %v844 = vpop.f32.mrb[0].mxu0
        %v845 = vadd.f32 0.0, %v844
        %v846 = vpop.f32.mrb[0].mxu0
        %v847 = vadd.f32 0.0, %v846
        %848 = vmatprep.mubr.f32.mxu0 0.0
        %849 = vmatmul.mubr.f32.gmra.mrb[0].mxu0 %v703
        %v850 = vpop.f32.mrb[0].mxu0
        %v851 = vadd.f32 0.0, %v850
        %v852 = vpop.f32.mrb[0].mxu0
        %v853 = vadd.f32 0.0, %v852
        %854 = vmatprep.mubr.f32.mxu0 0.0
        %855 = vmatmul.mubr.f32.gmra.mrb[0].mxu0 %v706
        %v856 = vpop.f32.mrb[0].mxu0
        %v857 = vadd.f32 0.0, %v856
        %v858 = vpop.f32.mrb[0].mxu0
        %v859 = vadd.f32 0.0, %v858
        %860 = vmatprep.mubr.f32.mxu0 0.0
        %861 = vmatmul.mubr.f32.gmra.mrb[0].mxu0 %v709
        %v862 = vpop.f32.mrb[0].mxu0
        %v863 = vadd.f32 0.0, %v862
        %v864 = vpop.f32.mrb[0].mxu0
        %v865 = vadd.f32 0.0, %v864
        %866 = vmatprep.mubr.f32.mxu0 0.0
        %867 = vmatmul.mubr.f32.gmra.mrb[0].mxu0 %v712
        %v868 = vpop.f32.mrb[0].mxu0
        %v869 = vadd.f32 0.0, %v868
        %v870 = vpop.f32.mrb[0].mxu0
        %v871 = vadd.f32 0.0, %v870
        %872 = vmatprep.mubr.f32.mxu0 0.0
        %873 = vmatmul.mubr.f32.gmra.mrb[0].mxu0 %v715
        %v874 = vpop.f32.mrb[0].mxu0
        %v875 = vadd.f32 0.0, %v874
        %v876 = vpop.f32.mrb[0].mxu0
        %v877 = vadd.f32 0.0, %v876
        %878 = vmatprep.mubr.f32.mxu0 0.0
        %879 = vmatmul.mubr.f32.gmra.mrb[0].mxu0 %v718
        %v880 = vpop.f32.mrb[0].mxu0
        %v881 = vadd.f32 0.0, %v880
        %v882 = vpop.f32.mrb[0].mxu0
        %v883 = vadd.f32 0.0, %v882
        %884 = vdwg.mxu0
        %v885 = vmax.f32 %v791, %v793
        %886 = vmax.xlane.f32.xlu0 %v885
        %v887 = vpop.xlane.xlu0 %886
        %v888 = vmax.f32 %v797, %v799
        %889 = vmax.xlane.f32.xlu0 %v888
        %v890 = vpop.xlane.xlu0 %889
        %v891 = vmax.f32 %v803, %v805
        %892 = vmax.xlane.f32.xlu0 %v891
        %v893 = vpop.xlane.xlu0 %892
        %v894 = vmax.f32 %v809, %v811
        %895 = vmax.xlane.f32.xlu0 %v894
        %v896 = vpop.xlane.xlu0 %895
        %v897 = vmax.f32 %v815, %v817
        %898 = vmax.xlane.f32.xlu0 %v897
        %v899 = vpop.xlane.xlu0 %898
        %v900 = vmax.f32 %v821, %v823
        %901 = vmax.xlane.f32.xlu0 %v900
        %v902 = vpop.xlane.xlu0 %901
        %v903 = vmax.f32 %v827, %v829
        %904 = vmax.xlane.f32.xlu0 %v903
        %v905 = vpop.xlane.xlu0 %904
        %v906 = vmax.f32 %v833, %v835
        %907 = vmax.xlane.f32.xlu0 %v906
        %v908 = vpop.xlane.xlu0 %907
        %v909 = vmax.f32 %v839, %v841
        %910 = vmax.xlane.f32.xlu0 %v909
        %v911 = vpop.xlane.xlu0 %910
        %v912 = vmax.f32 %v845, %v847
        %913 = vmax.xlane.f32.xlu0 %v912
        %v914 = vpop.xlane.xlu0 %913
        %v915 = vmax.f32 %v851, %v853
        %916 = vmax.xlane.f32.xlu0 %v915
        %v917 = vpop.xlane.xlu0 %916
        %v918 = vmax.f32 %v857, %v859
        %919 = vmax.xlane.f32.xlu0 %v918
        %v920 = vpop.xlane.xlu0 %919
        %v921 = vmax.f32 %v863, %v865
        %922 = vmax.xlane.f32.xlu0 %v921
        %v923 = vpop.xlane.xlu0 %922
        %v924 = vmax.f32 %v869, %v871
        %925 = vmax.xlane.f32.xlu0 %v924
        %v926 = vpop.xlane.xlu0 %925
        %v927 = vmax.f32 %v875, %v877
        %928 = vmax.xlane.f32.xlu0 %v927
        %v929 = vpop.xlane.xlu0 %928
        %v930 = vmax.f32 %v881, %v883
        %931 = vmax.xlane.f32.xlu0 %v930
        %v932 = vpop.xlane.xlu0 %931
        %v933 = vsub.f32 %v791, %v887
        %v934 = vsub.f32 %v793, %v887
        %v935 = vsub.f32 %v797, %v890
        %v936 = vsub.f32 %v799, %v890
        %v937 = vsub.f32 %v803, %v893
        %v938 = vsub.f32 %v805, %v893
        %v939 = vsub.f32 %v809, %v896
        %v940 = vsub.f32 %v811, %v896
        %v941 = vsub.f32 %v815, %v899
        %v942 = vsub.f32 %v817, %v899
        %v943 = vsub.f32 %v821, %v902
        %v944 = vsub.f32 %v823, %v902
        %v945 = vsub.f32 %v827, %v905
        %v946 = vsub.f32 %v829, %v905
        %v947 = vsub.f32 %v833, %v908
        %v948 = vsub.f32 %v835, %v908
        %v949 = vsub.f32 %v839, %v911
        %v950 = vsub.f32 %v841, %v911
        %v951 = vsub.f32 %v845, %v914
        %v952 = vsub.f32 %v847, %v914
        %v953 = vsub.f32 %v851, %v917
        %v954 = vsub.f32 %v853, %v917
        %v955 = vsub.f32 %v857, %v920
        %v956 = vsub.f32 %v859, %v920
        %v957 = vsub.f32 %v863, %v923
        %v958 = vsub.f32 %v865, %v923
        %v959 = vsub.f32 %v869, %v926
        %v960 = vsub.f32 %v871, %v926
        %v961 = vsub.f32 %v875, %v929
        %v962 = vsub.f32 %v877, %v929
        %v963 = vsub.f32 %v881, %v932
        %v964 = vsub.f32 %v883, %v932
        %v965 = vmul.f32 %v933, 1.442695
        %v966 = vpow.pop %v965
        %v967 = vmul.f32 %v934, 1.442695
        %v968 = vpow.pop %v967
        %v969 = vmul.f32 %v935, 1.442695
        %v970 = vpow.pop %v969
        %v971 = vmul.f32 %v936, 1.442695
        %v972 = vpow.pop %v971
        %v973 = vmul.f32 %v937, 1.442695
        %v974 = vpow.pop %v973
        %v975 = vmul.f32 %v938, 1.442695
        %v976 = vpow.pop %v975
        %v977 = vmul.f32 %v939, 1.442695
        %v978 = vpow.pop %v977
        %v979 = vmul.f32 %v940, 1.442695
        %v980 = vpow.pop %v979
        %v981 = vmul.f32 %v941, 1.442695
        %v982 = vpow.pop %v981
        %v983 = vmul.f32 %v942, 1.442695
        %v984 = vpow.pop %v983
        %v985 = vmul.f32 %v943, 1.442695
        %v986 = vpow.pop %v985
        %v987 = vmul.f32 %v944, 1.442695
        %v988 = vpow.pop %v987
        %v989 = vmul.f32 %v945, 1.442695
        %v990 = vpow.pop %v989
        %v991 = vmul.f32 %v946, 1.442695
        %v992 = vpow.pop %v991
        %v993 = vmul.f32 %v947, 1.442695
        %v994 = vpow.pop %v993
        %v995 = vmul.f32 %v948, 1.442695
        %v996 = vpow.pop %v995
        %v997 = vmul.f32 %v949, 1.442695
        %v998 = vpow.pop %v997
        %v999 = vmul.f32 %v950, 1.442695
        %v1000 = vpow.pop %v999
        %v1001 = vmul.f32 %v951, 1.442695
        %v1002 = vpow.pop %v1001
        %v1003 = vmul.f32 %v952, 1.442695
        %v1004 = vpow.pop %v1003
        %v1005 = vmul.f32 %v953, 1.442695
        %v1006 = vpow.pop %v1005
        %v1007 = vmul.f32 %v954, 1.442695
        %v1008 = vpow.pop %v1007
        %v1009 = vmul.f32 %v955, 1.442695
        %v1010 = vpow.pop %v1009
        %v1011 = vmul.f32 %v956, 1.442695
        %v1012 = vpow.pop %v1011
        %v1013 = vmul.f32 %v957, 1.442695
        %v1014 = vpow.pop %v1013
        %v1015 = vmul.f32 %v958, 1.442695
        %v1016 = vpow.pop %v1015
        %v1017 = vmul.f32 %v959, 1.442695
        %v1018 = vpow.pop %v1017
        %v1019 = vmul.f32 %v960, 1.442695
        %v1020 = vpow.pop %v1019
        %v1021 = vmul.f32 %v961, 1.442695
        %v1022 = vpow.pop %v1021
        %v1023 = vmul.f32 %v962, 1.442695
        %v1024 = vpow.pop %v1023
        %v1025 = vmul.f32 %v963, 1.442695
        %v1026 = vpow.pop %v1025
        %v1027 = vmul.f32 %v964, 1.442695
        %v1028 = vpow.pop %v1027
        %v1029 = vadd.f32 %v966, %v968
        %1030 = vadd.xlane.f32.xlu0 %v1029
        %v1031 = vpop.xlane.xlu0 %1030
        %v1032 = vadd.f32 %v970, %v972
        %1033 = vadd.xlane.f32.xlu0 %v1032
        %v1034 = vpop.xlane.xlu0 %1033
        %v1035 = vadd.f32 %v974, %v976
        %1036 = vadd.xlane.f32.xlu0 %v1035
        %v1037 = vpop.xlane.xlu0 %1036
        %v1038 = vadd.f32 %v978, %v980
        %1039 = vadd.xlane.f32.xlu0 %v1038
        %v1040 = vpop.xlane.xlu0 %1039
        %v1041 = vadd.f32 %v982, %v984
        %1042 = vadd.xlane.f32.xlu0 %v1041
        %v1043 = vpop.xlane.xlu0 %1042
        %v1044 = vadd.f32 %v986, %v988
        %1045 = vadd.xlane.f32.xlu0 %v1044
        %v1046 = vpop.xlane.xlu0 %1045
        %v1047 = vadd.f32 %v990, %v992
        %1048 = vadd.xlane.f32.xlu0 %v1047
        %v1049 = vpop.xlane.xlu0 %1048
        %v1050 = vadd.f32 %v994, %v996
        %1051 = vadd.xlane.f32.xlu0 %v1050
        %v1052 = vpop.xlane.xlu0 %1051
        %v1053 = vadd.f32 %v998, %v1000
        %1054 = vadd.xlane.f32.xlu0 %v1053
        %v1055 = vpop.xlane.xlu0 %1054
        %v1056 = vadd.f32 %v1002, %v1004
        %1057 = vadd.xlane.f32.xlu0 %v1056
        %v1058 = vpop.xlane.xlu0 %1057
        %v1059 = vadd.f32 %v1006, %v1008
        %1060 = vadd.xlane.f32.xlu0 %v1059
        %v1061 = vpop.xlane.xlu0 %1060
        %v1062 = vadd.f32 %v1010, %v1012
        %1063 = vadd.xlane.f32.xlu0 %v1062
        %v1064 = vpop.xlane.xlu0 %1063
        %v1065 = vadd.f32 %v1014, %v1016
        %1066 = vadd.xlane.f32.xlu0 %v1065
        %v1067 = vpop.xlane.xlu0 %1066
        %v1068 = vadd.f32 %v1018, %v1020
        %1069 = vadd.xlane.f32.xlu0 %v1068
        %v1070 = vpop.xlane.xlu0 %1069
        %v1071 = vadd.f32 %v1022, %v1024
        %1072 = vadd.xlane.f32.xlu0 %v1071
        %v1073 = vpop.xlane.xlu0 %1072
        %v1074 = vadd.f32 %v1026, %v1028
        %1075 = vadd.xlane.f32.xlu0 %v1074
        %v1076 = vpop.xlane.xlu0 %1075
        %v1077 = vrcp.pop %v1031
        %v1078 = vrcp.pop %v1034
        %v1079 = vrcp.pop %v1037
        %v1080 = vrcp.pop %v1040
        %v1081 = vrcp.pop %v1043
        %v1082 = vrcp.pop %v1046
        %v1083 = vrcp.pop %v1049
        %v1084 = vrcp.pop %v1052
        %v1085 = vrcp.pop %v1055
        %v1086 = vrcp.pop %v1058
        %v1087 = vrcp.pop %v1061
        %v1088 = vrcp.pop %v1064
        %v1089 = vrcp.pop %v1067
        %v1090 = vrcp.pop %v1070
        %v1091 = vrcp.pop %v1073
        %v1092 = vrcp.pop %v1076
        %v1093 = vmul.f32 %v966, %v1077
        %v1094 = vmul.f32 %v968, %v1077
        %v1095 = vmul.f32 %v970, %v1078
        %v1096 = vmul.f32 %v972, %v1078
        %v1097 = vmul.f32 %v974, %v1079
        %v1098 = vmul.f32 %v976, %v1079
        %v1099 = vmul.f32 %v978, %v1080
        %v1100 = vmul.f32 %v980, %v1080
        %v1101 = vmul.f32 %v982, %v1081
        %v1102 = vmul.f32 %v984, %v1081
        %v1103 = vmul.f32 %v986, %v1082
        %v1104 = vmul.f32 %v988, %v1082
        %v1105 = vmul.f32 %v990, %v1083
        %v1106 = vmul.f32 %v992, %v1083
        %v1107 = vmul.f32 %v994, %v1084
        %v1108 = vmul.f32 %v996, %v1084
        %v1109 = vmul.f32 %v998, %v1085
        %v1110 = vmul.f32 %v1000, %v1085
        %v1111 = vmul.f32 %v1002, %v1086
        %v1112 = vmul.f32 %v1004, %v1086
        %v1113 = vmul.f32 %v1006, %v1087
        %v1114 = vmul.f32 %v1008, %v1087
        %v1115 = vmul.f32 %v1010, %v1088
        %v1116 = vmul.f32 %v1012, %v1088
        %v1117 = vmul.f32 %v1014, %v1089
        %v1118 = vmul.f32 %v1016, %v1089
        %v1119 = vmul.f32 %v1018, %v1090
        %v1120 = vmul.f32 %v1020, %v1090
        %v1121 = vmul.f32 %v1022, %v1091
        %v1122 = vmul.f32 %v1024, %v1091
        %v1123 = vmul.f32 %v1026, %v1092
        %v1124 = vmul.f32 %v1028, %v1092
        %v1126 = vcombine.high %v546, %v546
        %1128 = vmatprep.subr.mxu0 %v1094
        %1129 = vmatpush1.xpose.msra.mxu0 %v1093
        %1130 = vmatprep.subr.mxu0 %v1096
        %1131 = vmatpush1.xpose.msra.mxu0 %v1095
        %1132 = vmatprep.subr.mxu0 %v1098
        %1133 = vmatpush1.xpose.msra.mxu0 %v1097
        %1134 = vmatprep.subr.mxu0 %v1100
        %1135 = vmatpush1.xpose.msra.mxu0 %v1099
        %1136 = vmatprep.subr.mxu0 %v1102
        %1137 = vmatpush1.xpose.msra.mxu0 %v1101
        %1138 = vmatprep.subr.mxu0 %v1104
        %1139 = vmatpush1.xpose.msra.mxu0 %v1103
        %1140 = vmatprep.subr.mxu0 %v1106
        %1141 = vmatpush1.xpose.msra.mxu0 %v1105
        %1142 = vmatprep.subr.mxu0 %v1108
        %1143 = vmatpush1.xpose.msra.mxu0 %v1107
        %1144 = vmatprep.subr.mxu0 %v1110
        %1145 = vmatpush1.xpose.msra.mxu0 %v1109
        %1146 = vmatprep.subr.mxu0 %v1112
        %1147 = vmatpush1.xpose.msra.mxu0 %v1111
        %1148 = vmatprep.subr.mxu0 %v1114
        %1149 = vmatpush1.xpose.msra.mxu0 %v1113
        %1150 = vmatprep.subr.mxu0 %v1116
        %1151 = vmatpush1.xpose.msra.mxu0 %v1115
        %1152 = vmatprep.subr.mxu0 %v1118
        %1153 = vmatpush1.xpose.msra.mxu0 %v1117
        %1154 = vmatprep.subr.mxu0 %v1120
        %1155 = vmatpush1.xpose.msra.mxu0 %v1119
        %1156 = vmatprep.subr.mxu0 %v1122
        %1157 = vmatpush1.xpose.msra.mxu0 %v1121
        %1158 = vmatprep.subr.mxu0 %v1124
        %1159 = vmatpush1.xpose.msra.mxu0 %v1123
        %1160 = vmatprep.subr.mxu0 0.0
        %1161 = vmatpush1.xpose.msra.mxu0 0.0
        %1162 = vmatprep.subr.mxu0 0.0
        %1163 = vmatpush1.xpose.msra.mxu0 0.0
        %1164 = vmatprep.subr.mxu0 0.0
        %1165 = vmatpush1.xpose.msra.mxu0 0.0
        %1166 = vmatprep.subr.mxu0 0.0
        %1167 = vmatpush1.xpose.msra.mxu0 0.0
        %1168 = vmatprep.subr.mxu0 0.0
        %1169 = vmatpush1.xpose.msra.mxu0 0.0
        %1170 = vmatprep.subr.mxu0 0.0
        %1171 = vmatpush1.xpose.msra.mxu0 0.0
        %1172 = vmatprep.subr.mxu0 0.0
        %1173 = vmatpush1.xpose.msra.mxu0 0.0
        %1174 = vmatprep.subr.mxu0 0.0
        %1175 = vmatpush1.xpose.msra.mxu0 0.0
        %1176 = vmatprep.subr.mxu0 0.0
        %1177 = vmatpush1.xpose.msra.mxu0 0.0
        %1178 = vmatprep.subr.mxu0 0.0
        %1179 = vmatpush1.xpose.msra.mxu0 0.0
        %1180 = vmatprep.subr.mxu0 0.0
        %1181 = vmatpush1.xpose.msra.mxu0 0.0
        %1182 = vmatprep.subr.mxu0 0.0
        %1183 = vmatpush1.xpose.msra.mxu0 0.0
        %1184 = vmatprep.subr.mxu0 0.0
        %1185 = vmatpush1.xpose.msra.mxu0 0.0
        %1186 = vmatprep.subr.mxu0 0.0
        %1187 = vmatpush1.xpose.msra.mxu0 0.0
        %1188 = vmatprep.subr.mxu0 0.0
        %1189 = vmatpush1.xpose.msra.mxu0 0.0
        %1190 = vmatprep.subr.mxu0 0.0
        %1191 = vmatpush1.xpose.msra.mxu0 0.0
        %1192 = vmatprep.mubr.f32.mxu0 %v1126
        %1193 = vmatmul.mubr.f32.gmra.mrb[0].mxu0 %v546
        %v1194 = vpop.f32.mrb[0].mxu0
        %v1195 = vadd.f32 0.0, %v1194
        %v1196 = vpop.f32.mrb[0].mxu0
        %1197 = vdwg.mxu0
        %s1198 = sld [smem:[#allocation4]]
        %v1199 = vstv %s1198
        %v1200 = vmul.f32 %v1199, %v1195
        %v1201 = vadd.f32 %v1200, %v552
        %1202 = vst [vmem:[%s346] sm:$0xf] %v1201
        %1203 = vst [vmem:[%s353] sm:$0xff] %v1093
        %1204 = vst [vmem:[%s353 + $0x8] sm:$0xff] %v1094
        %1205 = vst [vmem:[%s353 + $0x10] sm:$0xff] %v1095
        %1206 = vst [vmem:[%s353 + $0x18] sm:$0xff] %v1096
        %1207 = vst [vmem:[%s353 + $0x20] sm:$0xff] %v1097
        %1208 = vst [vmem:[%s353 + $0x28] sm:$0xff] %v1098
        %1209 = vst [vmem:[%s353 + $0x30] sm:$0xff] %v1099
        %1210 = vst [vmem:[%s353 + $0x38] sm:$0xff] %v1100
        %1211 = vst [vmem:[%s353 + $0x40] sm:$0xff] %v1101
        %1212 = vst [vmem:[%s353 + $0x48] sm:$0xff] %v1102
        %1213 = vst [vmem:[%s353 + $0x50] sm:$0xff] %v1103
        %1214 = vst [vmem:[%s353 + $0x58] sm:$0xff] %v1104
        %1215 = vst [vmem:[%s353 + $0x60] sm:$0xff] %v1105
        %1216 = vst [vmem:[%s353 + $0x68] sm:$0xff] %v1106
        %1217 = vst [vmem:[%s353 + $0x70] sm:$0xff] %v1107
        %1218 = vst [vmem:[%s353 + $0x78] sm:$0xff] %v1108
        %1219 = vst [vmem:[%s353 + $0x80] sm:$0xff] %v1109
        %1220 = vst [vmem:[%s353 + $0x88] sm:$0xff] %v1110
        %1221 = vst [vmem:[%s353 + $0x90] sm:$0xff] %v1111
        %1222 = vst [vmem:[%s353 + $0x98] sm:$0xff] %v1112
        %1223 = vst [vmem:[%s353 + $0xa0] sm:$0xff] %v1113
        %1224 = vst [vmem:[%s353 + $0xa8] sm:$0xff] %v1114
        %1225 = vst [vmem:[%s353 + $0xb0] sm:$0xff] %v1115
        %1226 = vst [vmem:[%s353 + $0xb8] sm:$0xff] %v1116
        %1227 = vst [vmem:[%s353 + $0xc0] sm:$0xff] %v1117
        %1228 = vst [vmem:[%s353 + $0xc8] sm:$0xff] %v1118
        %1229 = vst [vmem:[%s353 + $0xd0] sm:$0xff] %v1119
        %1230 = vst [vmem:[%s353 + $0xd8] sm:$0xff] %v1120
        %1231 = vst [vmem:[%s353 + $0xe0] sm:$0xff] %v1121
        %1232 = vst [vmem:[%s353 + $0xe8] sm:$0xff] %v1122
        %1233 = vst [vmem:[%s353 + $0xf0] sm:$0xff] %v1123
        %1234 = vst [vmem:[%s353 + $0xf8] sm:$0xff] %v1124
        %s1235 = sand.u32 %s223, 1
        %s1236 = scalar_lea.sflag [#allocation6], %s1235
        %s1237 = sand.u32 %s223, 1
        %s1238 = smul.addr %s1237, 4
        %s1239 = scalar_lea.vmem [#allocation5], %s1238
        %s1240 = sand.u32 %s251, 1
        %s1241 = scalar_lea.sflag [#allocation8], %s1240
        %s1242 = sand.u32 %s251, 1
        %s1243 = smul.addr %s1242, 256
        %s1244 = scalar_lea.vmem [#allocation7], %s1243
        // Predicated region
        $region57: #{tpu_custom_call.1} parent=51 // pred_check
          %p1245 = pneg %p233
        $region58: #{tpu_custom_call.1} parent=51 // pred_check_branch
          %1247 = sbr.rel (%p1245) target = $region60
        $region59: #{tpu_custom_call.1} parent=51 // pred_region
          %s1249 = ssub.s32 64, 64
          %1250 = vsyncadd %s1236, %s1249
          %s1251 = smul.addr %s32, 2
          %s1252 = sadd.s32 %s33, %s1251
          %s1253 = smul.addr %s1252, 64
          %s1254 = scalar_lea.hbm %s8, %s1253
          %s1256 = sshll.u32 %s1239, 4
          %s1257 = int_to_ptr.vmem [resolvable:$true] %s1256
          %1259 = dma.vmem_to_hbm [thread:$0]  %s1257, 64, %s1254, %s1236
        $region60: #{tpu_custom_call.1} parent=51 // pred_fallthru
          _
        // Predicated region
        $region61: #{tpu_custom_call.1} parent=51 // pred_check
          %p1260 = pneg %p261
        $region62: #{tpu_custom_call.1} parent=51 // pred_check_branch
          %1262 = sbr.rel (%p1260) target = $region64
        $region63: #{tpu_custom_call.1} parent=51 // pred_region
          %s1263 = smul.u32 16, %s33
          %s1265 = ssub.s32 4096, 4096
          %1266 = vsyncadd %s1241, %s1265
          %s1267 = smul.addr %s1263, 2
          %s1268 = smul.addr %s32, 64
          %s1269 = sadd.s32 %s1267, %s1268
          %s1270 = smul.addr %s1269, 128
          %s1271 = scalar_lea.hbm %s9, %s1270
          %s1272 = sshll.u32 %s1244, 4
          %s1273 = int_to_ptr.vmem [resolvable:$true] %s1272
          %1278 = dma.vmem_to_hbm [thread:$0]  %s1273, 4096, %s1271, %s1241, 256, 256, 16
        $region64: #{tpu_custom_call.1} parent=51 // pred_fallthru
          _
      $region52: #{tpu_custom_call.1} parent=5 // pred_fallthru
        _
      %p1279 = scmp.le.s32.totalorder 2, %s23
      // Predicated region
      $region65: #{tpu_custom_call.1} parent=5 // pred_check
        %p1280 = pneg %p1279
      $region66: #{tpu_custom_call.1} parent=5 // pred_check_branch
        %1282 = sbr.rel (%p1280) target = $region68
      $region67: #{tpu_custom_call.1} parent=5 // pred_region
        %s1283 = ssub.s32 %s23, 2
        // Predicated region
        $region69: #{tpu_custom_call.1} parent=67 // pred_check
          %p1284 = pneg %p239
        $region70: #{tpu_custom_call.1} parent=67 // pred_check_branch
          %1286 = sbr.rel (%p1284) target = $region72
        $region71: #{tpu_custom_call.1} parent=67 // pred_region
          %s1287 = sand.u32 %s224, 1
          %s1288 = scalar_lea.sflag [#allocation6], %s1287
          %s1289 = sand.u32 %s224, 1
          %s1290 = smul.addr %s1289, 4
          %s1291 = scalar_lea.vmem [#allocation5], %s1290
          %1292 = dma.done %s1288, 64
        $region72: #{tpu_custom_call.1} parent=67 // pred_fallthru
          _
        // Predicated region
        $region73: #{tpu_custom_call.1} parent=67 // pred_check
          %p1293 = pneg %p267
        $region74: #{tpu_custom_call.1} parent=67 // pred_check_branch
          %1295 = sbr.rel (%p1293) target = $region76
        $region75: #{tpu_custom_call.1} parent=67 // pred_region
          %s1296 = sand.u32 %s252, 1
          %s1297 = scalar_lea.sflag [#allocation8], %s1296
          %s1298 = sand.u32 %s252, 1
          %s1299 = smul.addr %s1298, 256
          %s1300 = scalar_lea.vmem [#allocation7], %s1299
          %1301 = dma.done %s1297, 4096
        $region76: #{tpu_custom_call.1} parent=67 // pred_fallthru
          _
      $region68: #{tpu_custom_call.1} parent=5 // pred_fallthru
        _
    $region6: #{tpu_custom_call.1} parent=1 // loop_footer
      %s27 = sadd.s32 1, %s23
    $region7: #{tpu_custom_call.1} parent=1 // loop_footer_branch
      %22 = sbr.rel target = $region3
    $region8: #{tpu_custom_call.1} parent=1 // loop_exit
      _
    %1302 = vsyncpa [#allocation6], 1
    %s1303 = scalar_lea.sflag [#allocation6], 1
    %1304 = vsyncpa %s1303, 1
    %1305 = vsyncpa [#allocation8], 1
    %s1306 = scalar_lea.sflag [#allocation8], 1
    %1307 = vsyncpa %s1306, 1

</llo_original>
